<compile_context>
chip_gen: v5e
topology: v5e:2x2
jax: 0.10.0
libtpu: 0.0.40
codegen_flags: <defaults>
</compile_context>

<pallas_src>
import functools

import jax
import jax.numpy as jnp
import numpy as np
from jax import lax
from jax.experimental import pallas as pl
from jax.experimental.pallas import tpu as pltpu


def mhcac_kernel(et_ref, kv_ref,
                 wq_ref, bq_ref, wkv_ref, bkv_ref,
                 w1_ref, b1_ref, w2_ref, b2_ref,
                 g1_ref, be1_ref, g2_ref, be2_ref,
                 out_ref, attn_ref,
                 *, num_heads, head_dim, num_expert_tokens, num_patches,
                 batch_block, query_dim, eps=1e-5):
    T, H, hd = num_expert_tokens, num_heads, head_dim
    P, Bb, Dq = num_patches, batch_block, query_dim
    inv_scale = 1.0 / float(hd) ** 0.5

    et2 = et_ref[...]        # (Bb*T, Dq)   rows ordered (batch, expert_token)
    kv2 = kv_ref[...]        # (Bb*P, Dkv)  rows ordered (batch, patch)

    # ---- Q projection: one wide matmul against the stacked per-token weights,
    #      then pick each row's own token block with a sublane mask (replaces a
    #      T-way loop of tiny (1,Dq)x(Dq,Dq) matmuls).
    q_wide = jnp.dot(et2, wq_ref[...],
                     preferred_element_type=jnp.float32)            # (Bb*T, T*Dq)
    tok_id = lax.rem(lax.broadcasted_iota(jnp.int32, (Bb * T, 1), 0), T)
    q2 = jnp.zeros((Bb * T, Dq), jnp.float32)
    for t in range(T):
        sel = (tok_id == t).astype(jnp.float32)                      # (Bb*T, 1)
        q2 = q2 + q_wide[:, t * Dq:(t + 1) * Dq] * sel
    q2 = (q2 + bq_ref[...]) * inv_scale     # fold 1/sqrt(head_dim) into Q once
    q3 = q2.reshape(Bb, T, Dq)

    # ---- fused K/V projection: one matmul produces [K | V]
    kvp = jnp.dot(kv2, wkv_ref[...],
                  preferred_element_type=jnp.float32) + bkv_ref[...]  # (Bb*P, 2*Dq)
    k3 = kvp[:, :Dq].reshape(Bb, P, Dq)
    v3 = kvp[:, Dq:].reshape(Bb, P, Dq)

    # ---- attention: vectorized over (batch, expert tokens), unrolled over heads
    w_heads = []
    o_heads = []
    for h in range(H):
        qh = q3[:, :, h * hd:(h + 1) * hd]          # (Bb, T, hd)
        kh = k3[:, :, h * hd:(h + 1) * hd]          # (Bb, P, hd)
        vh = v3[:, :, h * hd:(h + 1) * hd]          # (Bb, P, hd)
        s = jnp.einsum('btd,bpd->btp', qh, kh,
                       preferred_element_type=jnp.float32)           # (Bb, T, P)
        m = jnp.max(s, axis=-1, keepdims=True)
        e = jnp.exp(s - m)
        denom = jnp.sum(e, axis=-1, keepdims=True)
        w = e * pl.reciprocal(denom, approx=True)                     # (Bb, T, P)
        w_heads.append(w)
        o_heads.append(jnp.einsum('btp,bpd->btd', w, vh,
                                  preferred_element_type=jnp.float32))

    # Single dense stores; attention output / weights never touch VMEM scratch.
    attn_ref[...] = jnp.concatenate(w_heads, axis=-1)                 # (Bb, T, H*P)
    attn_out = jnp.concatenate(o_heads, axis=-1).reshape(Bb * T, Dq)

    # ---- residual + LayerNorm 1 (single-pass E[x], E[x^2])
    x = et2 + attn_out
    mu = jnp.mean(x, axis=-1, keepdims=True)
    msq = jnp.mean(x * x, axis=-1, keepdims=True)
    x1 = (x - mu) * lax.rsqrt(msq - mu * mu + eps) * g1_ref[...] + be1_ref[...]

    # ---- feed-forward (dropouts are identity in eval mode)
    h1 = jnp.dot(x1, w1_ref[...], preferred_element_type=jnp.float32) + b1_ref[...]
    h1 = jnp.maximum(h1, 0.0)
    ff = jnp.dot(h1, w2_ref[...], preferred_element_type=jnp.float32) + b2_ref[...]

    # ---- residual + LayerNorm 2
    y = x1 + ff
    mu2 = jnp.mean(y, axis=-1, keepdims=True)
    msq2 = jnp.mean(y * y, axis=-1, keepdims=True)
    out_ref[...] = ((y - mu2) * lax.rsqrt(msq2 - mu2 * mu2 + eps)
                    * g2_ref[...] + be2_ref[...])


def _pick_batch_block(B, T, P, Dq, Dkv, H):
    """Largest divisor Bb of B with sublane-aligned row counts and tiny VMEM tiles."""
    for Bb in range(B, 0, -1):
        if B % Bb:
            continue
        rows_q, rows_kv = Bb * T, Bb * P
        # (8,128) rule: sublane dim must be a multiple of 8 OR the full array dim.
        if rows_q % 8 and Bb != B:
            continue
        if rows_kv % 8 and Bb != B:
            continue
        # keep double-buffered activation tiles comfortably small (< ~4 MiB)
        tile_bytes = 4 * (rows_q * Dq + rows_kv * Dkv          # inputs
                          + rows_q * Dq + Bb * T * H * P)      # outputs
        if 2 * tile_bytes > (4 << 20) and Bb != 1:
            continue
        return Bb
    return B


def mhcac_forward(expert_tokens, key_value_embeddings, params, num_heads):
    (WQ, bQ, WK, bK, WV, bV, W1, b1, W2, b2, g1, be1, g2, be2) = params
    B, T, Dq = expert_tokens.shape
    _, P, Dkv = key_value_embeddings.shape
    H = num_heads
    assert Dq % H == 0, "query_dim must be divisible by num_heads"
    hd = Dq // H

    Bb = _pick_batch_block(B, T, P, Dq, Dkv, H)

    # ---- host-side parameter packing (layout plumbing, done outside the kernel)
    # stacked per-token query weights: column block t holds W_Q[t] -> (Dq, T*Dq)
    wq_wide = jnp.transpose(WQ, (1, 0, 2)).reshape(Dq, T * Dq)
    bq_rep = jnp.tile(bQ, (Bb, 1))                       # (Bb*T, Dq), row r -> b_Q[r % T]
    wkv = jnp.concatenate([WK, WV], axis=1)              # (Dkv, 2*Dq)
    bkv = jnp.concatenate([bK, bV], axis=1)              # (1, 2*Dq)

    # flat, sublane/lane-friendly views of the activations (free HBM reshapes)
    et2 = expert_tokens.reshape(B * T, Dq)
    kv2 = key_value_embeddings.reshape(B * P, Dkv)

    kernel = functools.partial(
        mhcac_kernel, num_heads=H, head_dim=hd, num_expert_tokens=T,
        num_patches=P, batch_block=Bb, query_dim=Dq)

    def full(shape):
        zeros = (0,) * len(shape)
        return pl.BlockSpec(shape, lambda b: zeros)

    grid_spec = pltpu.PrefetchScalarGridSpec(
        num_scalar_prefetch=0,
        grid=(B // Bb,),
        in_specs=[
            pl.BlockSpec((Bb * T, Dq), lambda b: (b, 0)),      # expert tokens (flat rows)
            pl.BlockSpec((Bb * P, Dkv), lambda b: (b, 0)),     # key/value embeddings (flat rows)
            full((Dq, T * Dq)), full((Bb * T, Dq)),            # stacked W_Q, tiled b_Q
            full((Dkv, 2 * Dq)), full((1, 2 * Dq)),            # fused W_K|W_V, b_K|b_V
            full((Dq, 4 * Dq)), full((1, 4 * Dq)),             # FF W1, b1
            full((4 * Dq, Dq)), full((1, Dq)),                 # FF W2, b2
            full((1, Dq)), full((1, Dq)),                      # norm1 gamma, beta
            full((1, Dq)), full((1, Dq)),                      # norm2 gamma, beta
        ],
        out_specs=[
            pl.BlockSpec((Bb * T, Dq), lambda b: (b, 0)),      # output (flat rows)
            pl.BlockSpec((Bb, T, H * P), lambda b: (b, 0, 0)), # attention weight slab
        ],
    )

    out2, attn = pl.pallas_call(
        kernel,
        out_shape=(jax.ShapeDtypeStruct((B * T, Dq), jnp.float32),
                   jax.ShapeDtypeStruct((B, T, H * P), jnp.float32)),
        grid_spec=grid_spec,
        compiler_params=pltpu.CompilerParams(
            dimension_semantics=("parallel",)),
    )(et2, kv2, wq_wide, bq_rep, wkv, bkv, W1, b1, W2, b2, g1, be1, g2, be2)

    out = out2.reshape(B, T, Dq)
    attn_list = [attn[:, i, :].reshape(B, 1, H, P) for i in range(T)]
    return out, attn_list


def mhcac_reference(expert_tokens, kv, params, num_heads, eps=1e-5):
    (WQ, bQ, WK, bK, WV, bV, W1, b1, W2, b2, g1, be1, g2, be2) = params
    B, T, Dq = expert_tokens.shape
    _, P, _ = kv.shape
    H = num_heads
    hd = Dq // H
    hp = lax.Precision.HIGHEST

    Q = jnp.einsum('btd,tdo->bto', expert_tokens, WQ, precision=hp) + bQ[None]
    Q = Q.reshape(B, T, H, hd)
    K = (jnp.dot(kv, WK, precision=hp) + bK).reshape(B, P, H, hd)
    V = (jnp.dot(kv, WV, precision=hp) + bV).reshape(B, P, H, hd)
    scale = jnp.sqrt(jnp.float32(hd))

    s = jnp.einsum('bthd,bphd->bthp', Q, K, precision=hp) / scale
    w = jax.nn.softmax(s, axis=-1)
    attn_out = jnp.einsum('bthp,bphd->bthd', w, V, precision=hp).reshape(B, T, Dq)

    def ln(x, g, be):
        mu = jnp.mean(x, axis=-1, keepdims=True)
        var = jnp.mean((x - mu) ** 2, axis=-1, keepdims=True)
        return (x - mu) * lax.rsqrt(var + eps) * g + be

    x1 = ln(expert_tokens + attn_out, g1, be1)
    ff = jnp.dot(jnp.maximum(jnp.dot(x1, W1, precision=hp) + b1, 0.0), W2, precision=hp) + b2
    out = ln(x1 + ff, g2, be2)
    return out, w  # w: (B, T, H, P)


if __name__ == "__main__":
    # Small shapes consistent with the module.
    B = 2                    # batch
    T = 4                    # num_expert_tokens
    Dq = 32                  # query_dim
    Dkv = 16                 # key_value_dim
    H = 4                    # num_heads
    P = 8                    # num_patches (sequence length of key/value embeddings)

    key = jax.random.PRNGKey(0)
    ks = jax.random.split(key, 20)
    f32 = jnp.float32

    expert_tokens = jax.random.normal(ks[0], (B, T, Dq), dtype=f32)
    kv_embeddings = jax.random.normal(ks[1], (B, P, Dkv), dtype=f32)

    # Deterministic parameter init (weights stored as (in, out), i.e. y = x @ W + b).
    params = (
        0.1 * jax.random.normal(ks[2], (T, Dq, Dq), dtype=f32),       # W_Q stack
        0.1 * jax.random.normal(ks[3], (T, Dq), dtype=f32),           # b_Q stack
        0.1 * jax.random.normal(ks[4], (Dkv, Dq), dtype=f32),         # W_K
        0.1 * jax.random.normal(ks[5], (1, Dq), dtype=f32),           # b_K
        0.1 * jax.random.normal(ks[6], (Dkv, Dq), dtype=f32),         # W_V
        0.1 * jax.random.normal(ks[7], (1, Dq), dtype=f32),           # b_V
        0.1 * jax.random.normal(ks[8], (Dq, 4 * Dq), dtype=f32),      # FF W1
        0.1 * jax.random.normal(ks[9], (1, 4 * Dq), dtype=f32),       # FF b1
        0.1 * jax.random.normal(ks[10], (4 * Dq, Dq), dtype=f32),     # FF W2
        0.1 * jax.random.normal(ks[11], (1, Dq), dtype=f32),          # FF b2
        jnp.ones((1, Dq), dtype=f32),                                 # norm1 gamma
        jnp.zeros((1, Dq), dtype=f32),                                # norm1 beta
        jnp.ones((1, Dq), dtype=f32),                                 # norm2 gamma
        jnp.zeros((1, Dq), dtype=f32),                                # norm2 beta
    )

    out, attn_list = mhcac_forward(expert_tokens, kv_embeddings, params, num_heads=H)
    out = jax.block_until_ready(out)
    attn_list = [jax.block_until_ready(a) for a in attn_list]

    # Sanity check against a pure-JAX reference (tolerance allows the approx
    # EUP reciprocal in the softmax denominator).
    ref_out, ref_w = mhcac_reference(expert_tokens, kv_embeddings, params, num_heads=H)
    np.testing.assert_allclose(np.asarray(out), np.asarray(ref_out), rtol=2e-3, atol=2e-3)
    for i in range(T):
        np.testing.assert_allclose(np.asarray(attn_list[i][:, 0]),
                                   np.asarray(ref_w[:, i]), rtol=2e-3, atol=2e-3)

    print("KERNEL_OK")
</pallas_src>

<mosaic_0001>
module attributes {stable_mosaic.version = 11 : i64} {
  func.func @mhcac_kernel(%arg0: i32, %arg1: memref<8x32xf32, #tpu.memory_space<vmem>>, %arg2: memref<16x16xf32, #tpu.memory_space<vmem>>, %arg3: memref<32x128xf32, #tpu.memory_space<vmem>>, %arg4: memref<8x32xf32, #tpu.memory_space<vmem>>, %arg5: memref<16x64xf32, #tpu.memory_space<vmem>>, %arg6: memref<1x64xf32, #tpu.memory_space<vmem>>, %arg7: memref<32x128xf32, #tpu.memory_space<vmem>>, %arg8: memref<1x128xf32, #tpu.memory_space<vmem>>, %arg9: memref<128x32xf32, #tpu.memory_space<vmem>>, %arg10: memref<1x32xf32, #tpu.memory_space<vmem>>, %arg11: memref<1x32xf32, #tpu.memory_space<vmem>>, %arg12: memref<1x32xf32, #tpu.memory_space<vmem>>, %arg13: memref<1x32xf32, #tpu.memory_space<vmem>>, %arg14: memref<1x32xf32, #tpu.memory_space<vmem>>, %arg15: memref<8x32xf32, #tpu.memory_space<vmem>>, %arg16: memref<2x4x32xf32, #tpu.memory_space<vmem>>) attributes {dimension_semantics = [#tpu.dimension_semantics<parallel>], iteration_bounds = array<i64: 1>, scalar_prefetch = 0 : i64, scratch_operands = 0 : i64, tpu.core_type = #tpu.core_type<tc>, window_params = [{transform_indices = @transform_0, window_bounds = array<i64: 8, 32>}, {transform_indices = @transform_1, window_bounds = array<i64: 16, 16>}, {pipeline_mode = #tpu.pipeline_mode<synchronous>, transform_indices = @transform_2, window_bounds = array<i64: 32, 128>}, {pipeline_mode = #tpu.pipeline_mode<synchronous>, transform_indices = @transform_3, window_bounds = array<i64: 8, 32>}, {pipeline_mode = #tpu.pipeline_mode<synchronous>, transform_indices = @transform_4, window_bounds = array<i64: 16, 64>}, {pipeline_mode = #tpu.pipeline_mode<synchronous>, transform_indices = @transform_5, window_bounds = array<i64: 1, 64>}, {pipeline_mode = #tpu.pipeline_mode<synchronous>, transform_indices = @transform_6, window_bounds = array<i64: 32, 128>}, {pipeline_mode = #tpu.pipeline_mode<synchronous>, transform_indices = @transform_7, window_bounds = array<i64: 1, 128>}, {pipeline_mode = #tpu.pipeline_mode<synchronous>, transform_indices = @transform_8, window_bounds = array<i64: 128, 32>}, {pipeline_mode = #tpu.pipeline_mode<synchronous>, transform_indices = @transform_9, window_bounds = array<i64: 1, 32>}, {pipeline_mode = #tpu.pipeline_mode<synchronous>, transform_indices = @transform_10, window_bounds = array<i64: 1, 32>}, {pipeline_mode = #tpu.pipeline_mode<synchronous>, transform_indices = @transform_11, window_bounds = array<i64: 1, 32>}, {pipeline_mode = #tpu.pipeline_mode<synchronous>, transform_indices = @transform_12, window_bounds = array<i64: 1, 32>}, {pipeline_mode = #tpu.pipeline_mode<synchronous>, transform_indices = @transform_13, window_bounds = array<i64: 1, 32>}, {transform_indices = @transform_14, window_bounds = array<i64: 8, 32>}, {transform_indices = @transform_15, window_bounds = array<i64: 2, 4, 32>}]} {
    %c0 = arith.constant 0 : index
    %c0_0 = arith.constant 0 : index
    %0 = vector.load %arg1[%c0, %c0_0] : memref<8x32xf32, #tpu.memory_space<vmem>>, vector<8x32xf32>
    %c0_1 = arith.constant 0 : index
    %c0_2 = arith.constant 0 : index
    %1 = vector.load %arg2[%c0_1, %c0_2] : memref<16x16xf32, #tpu.memory_space<vmem>>, vector<16x16xf32>
    %c0_3 = arith.constant 0 : index
    %c0_4 = arith.constant 0 : index
    %2 = vector.load %arg3[%c0_3, %c0_4] : memref<32x128xf32, #tpu.memory_space<vmem>>, vector<32x128xf32>
    %cst = arith.constant dense<0.000000e+00> : vector<8x128xf32>
    %3 = tpu.matmul %0, %2, %cst {dimension_numbers = #tpu.dot_dimension_numbers<[1], [0], [0], [1], [0, 0, 1, 1], [], []>} : vector<8x32xf32>, vector<32x128xf32>, vector<8x128xf32> -> vector<8x128xf32>
    %4 = tpu.iota {dimensions = array<i32: 0>} : vector<8x1xi32>
    %c4_i32 = arith.constant 4 : i32
    %5 = vector.broadcast %c4_i32 : i32 to vector<8x1xi32>
    %6 = arith.remsi %4, %5 : vector<8x1xi32>
    %cst_5 = arith.constant 0.000000e+00 : f32
    %7 = vector.broadcast %cst_5 : f32 to vector<8x32xf32>
    %c0_i32 = arith.constant 0 : i32
    %8 = vector.broadcast %c0_i32 : i32 to vector<8x1xi32>
    %9 = arith.cmpi eq, %6, %8 : vector<8x1xi32>
    %10 = arith.extui %9 : vector<8x1xi1> to vector<8x1xi32>
    %11 = arith.sitofp %10 : vector<8x1xi32> to vector<8x1xf32>
    %12 = vector.extract_strided_slice %3 {offsets = [0, 0], sizes = [8, 32], strides = [1, 1]} : vector<8x128xf32> to vector<8x32xf32>
    %13 = vector.broadcast %11 : vector<8x1xf32> to vector<8x32xf32>
    %14 = arith.mulf %12, %13 : vector<8x32xf32>
    %15 = arith.addf %7, %14 : vector<8x32xf32>
    %c1_i32 = arith.constant 1 : i32
    %16 = vector.broadcast %c1_i32 : i32 to vector<8x1xi32>
    %17 = arith.cmpi eq, %6, %16 : vector<8x1xi32>
    %18 = arith.extui %17 : vector<8x1xi1> to vector<8x1xi32>
    %19 = arith.sitofp %18 : vector<8x1xi32> to vector<8x1xf32>
    %20 = vector.extract_strided_slice %3 {offsets = [0, 32], sizes = [8, 32], strides = [1, 1]} : vector<8x128xf32> to vector<8x32xf32>
    %21 = vector.broadcast %19 : vector<8x1xf32> to vector<8x32xf32>
    %22 = arith.mulf %20, %21 : vector<8x32xf32>
    %23 = arith.addf %15, %22 : vector<8x32xf32>
    %c2_i32 = arith.constant 2 : i32
    %24 = vector.broadcast %c2_i32 : i32 to vector<8x1xi32>
    %25 = arith.cmpi eq, %6, %24 : vector<8x1xi32>
    %26 = arith.extui %25 : vector<8x1xi1> to vector<8x1xi32>
    %27 = arith.sitofp %26 : vector<8x1xi32> to vector<8x1xf32>
    %28 = vector.extract_strided_slice %3 {offsets = [0, 64], sizes = [8, 32], strides = [1, 1]} : vector<8x128xf32> to vector<8x32xf32>
    %29 = vector.broadcast %27 : vector<8x1xf32> to vector<8x32xf32>
    %30 = arith.mulf %28, %29 : vector<8x32xf32>
    %31 = arith.addf %23, %30 : vector<8x32xf32>
    %c3_i32 = arith.constant 3 : i32
    %32 = vector.broadcast %c3_i32 : i32 to vector<8x1xi32>
    %33 = arith.cmpi eq, %6, %32 : vector<8x1xi32>
    %34 = arith.extui %33 : vector<8x1xi1> to vector<8x1xi32>
    %35 = arith.sitofp %34 : vector<8x1xi32> to vector<8x1xf32>
    %36 = vector.extract_strided_slice %3 {offsets = [0, 96], sizes = [8, 32], strides = [1, 1]} : vector<8x128xf32> to vector<8x32xf32>
    %37 = vector.broadcast %35 : vector<8x1xf32> to vector<8x32xf32>
    %38 = arith.mulf %36, %37 : vector<8x32xf32>
    %39 = arith.addf %31, %38 : vector<8x32xf32>
    %c0_6 = arith.constant 0 : index
    %c0_7 = arith.constant 0 : index
    %40 = vector.load %arg4[%c0_6, %c0_7] : memref<8x32xf32, #tpu.memory_space<vmem>>, vector<8x32xf32>
    %41 = arith.addf %39, %40 : vector<8x32xf32>
    %cst_8 = arith.constant 0.353553385 : f32
    %42 = vector.broadcast %cst_8 : f32 to vector<8x32xf32>
    %43 = arith.mulf %41, %42 : vector<8x32xf32>
    %44 = vector.shape_cast %43 : vector<8x32xf32> to vector<2x4x32xf32>
    %c0_9 = arith.constant 0 : index
    %c0_10 = arith.constant 0 : index
    %45 = vector.load %arg5[%c0_9, %c0_10] : memref<16x64xf32, #tpu.memory_space<vmem>>, vector<16x64xf32>
    %cst_11 = arith.constant dense<0.000000e+00> : vector<16x64xf32>
    %46 = tpu.matmul %1, %45, %cst_11 {dimension_numbers = #tpu.dot_dimension_numbers<[1], [0], [0], [1], [0, 0, 1, 1], [], []>} : vector<16x16xf32>, vector<16x64xf32>, vector<16x64xf32> -> vector<16x64xf32>
    %c0_12 = arith.constant 0 : index
    %c0_13 = arith.constant 0 : index
    %47 = vector.load %arg6[%c0_12, %c0_13] : memref<1x64xf32, #tpu.memory_space<vmem>>, vector<1x64xf32>
    %48 = vector.broadcast %47 : vector<1x64xf32> to vector<16x64xf32>
    %49 = arith.addf %46, %48 : vector<16x64xf32>
    %50 = vector.extract_strided_slice %49 {offsets = [0, 0], sizes = [16, 32], strides = [1, 1]} : vector<16x64xf32> to vector<16x32xf32>
    %51 = vector.shape_cast %50 : vector<16x32xf32> to vector<2x8x32xf32>
    %52 = vector.extract_strided_slice %49 {offsets = [0, 32], sizes = [16, 32], strides = [1, 1]} : vector<16x64xf32> to vector<16x32xf32>
    %53 = vector.shape_cast %52 : vector<16x32xf32> to vector<2x8x32xf32>
    %54 = vector.extract_strided_slice %44 {offsets = [0, 0, 0], sizes = [2, 4, 8], strides = [1, 1, 1]} : vector<2x4x32xf32> to vector<2x4x8xf32>
    %55 = vector.extract_strided_slice %51 {offsets = [0, 0, 0], sizes = [2, 8, 8], strides = [1, 1, 1]} : vector<2x8x32xf32> to vector<2x8x8xf32>
    %56 = vector.extract_strided_slice %53 {offsets = [0, 0, 0], sizes = [2, 8, 8], strides = [1, 1, 1]} : vector<2x8x32xf32> to vector<2x8x8xf32>
    "tpu.trace_start"() <{level = 10 : i32, message = "btd,bpd->btp"}> : () -> ()
    %cst_14 = arith.constant dense<0.000000e+00> : vector<2x4x8xf32>
    %57 = tpu.matmul %54, %55, %cst_14 {dimension_numbers = #tpu.dot_dimension_numbers<[2], [2], [1], [1], [0, 0, 0, 1, 1, 1], [0], [0]>} : vector<2x4x8xf32>, vector<2x8x8xf32>, vector<2x4x8xf32> -> vector<2x4x8xf32>
    "tpu.trace_stop"() : () -> ()
    %cst_15 = arith.constant dense<0xFF800000> : vector<2x4xf32>
    %58 = vector.multi_reduction <maximumf>, %57, %cst_15 [2] : vector<2x4x8xf32> to vector<2x4xf32>
    %59 = vector.shape_cast %58 : vector<2x4xf32> to vector<2x4x1xf32>
    %60 = vector.broadcast %59 : vector<2x4x1xf32> to vector<2x4x8xf32>
    %61 = arith.subf %57, %60 : vector<2x4x8xf32>
    %62 = math.exp %61 : vector<2x4x8xf32>
    %cst_16 = arith.constant dense<0.000000e+00> : vector<2x4xf32>
    %63 = vector.multi_reduction <add>, %62, %cst_16 [2] : vector<2x4x8xf32> to vector<2x4xf32>
    %64 = vector.shape_cast %63 : vector<2x4xf32> to vector<2x4x1xf32>
    %65 = tpu.reciprocal %64 {approx = true} : vector<2x4x1xf32> -> vector<2x4x1xf32>
    %66 = vector.broadcast %65 : vector<2x4x1xf32> to vector<2x4x8xf32>
    %67 = arith.mulf %62, %66 : vector<2x4x8xf32>
    "tpu.trace_start"() <{level = 10 : i32, message = "btp,bpd->btd"}> : () -> ()
    %cst_17 = arith.constant dense<0.000000e+00> : vector<2x4x8xf32>
    %68 = tpu.matmul %67, %56, %cst_17 {dimension_numbers = #tpu.dot_dimension_numbers<[2], [1], [1], [2], [0, 0, 0, 1, 1, 2], [0], [0]>} : vector<2x4x8xf32>, vector<2x8x8xf32>, vector<2x4x8xf32> -> vector<2x4x8xf32>
    "tpu.trace_stop"() : () -> ()
    %69 = vector.extract_strided_slice %44 {offsets = [0, 0, 8], sizes = [2, 4, 8], strides = [1, 1, 1]} : vector<2x4x32xf32> to vector<2x4x8xf32>
    %70 = vector.extract_strided_slice %51 {offsets = [0, 0, 8], sizes = [2, 8, 8], strides = [1, 1, 1]} : vector<2x8x32xf32> to vector<2x8x8xf32>
    %71 = vector.extract_strided_slice %53 {offsets = [0, 0, 8], sizes = [2, 8, 8], strides = [1, 1, 1]} : vector<2x8x32xf32> to vector<2x8x8xf32>
    "tpu.trace_start"() <{level = 10 : i32, message = "btd,bpd->btp"}> : () -> ()
    %cst_18 = arith.constant dense<0.000000e+00> : vector<2x4x8xf32>
    %72 = tpu.matmul %69, %70, %cst_18 {dimension_numbers = #tpu.dot_dimension_numbers<[2], [2], [1], [1], [0, 0, 0, 1, 1, 1], [0], [0]>} : vector<2x4x8xf32>, vector<2x8x8xf32>, vector<2x4x8xf32> -> vector<2x4x8xf32>
    "tpu.trace_stop"() : () -> ()
    %cst_19 = arith.constant dense<0xFF800000> : vector<2x4xf32>
    %73 = vector.multi_reduction <maximumf>, %72, %cst_19 [2] : vector<2x4x8xf32> to vector<2x4xf32>
    %74 = vector.shape_cast %73 : vector<2x4xf32> to vector<2x4x1xf32>
    %75 = vector.broadcast %74 : vector<2x4x1xf32> to vector<2x4x8xf32>
    %76 = arith.subf %72, %75 : vector<2x4x8xf32>
    %77 = math.exp %76 : vector<2x4x8xf32>
    %cst_20 = arith.constant dense<0.000000e+00> : vector<2x4xf32>
    %78 = vector.multi_reduction <add>, %77, %cst_20 [2] : vector<2x4x8xf32> to vector<2x4xf32>
    %79 = vector.shape_cast %78 : vector<2x4xf32> to vector<2x4x1xf32>
    %80 = tpu.reciprocal %79 {approx = true} : vector<2x4x1xf32> -> vector<2x4x1xf32>
    %81 = vector.broadcast %80 : vector<2x4x1xf32> to vector<2x4x8xf32>
    %82 = arith.mulf %77, %81 : vector<2x4x8xf32>
    "tpu.trace_start"() <{level = 10 : i32, message = "btp,bpd->btd"}> : () -> ()
    %cst_21 = arith.constant dense<0.000000e+00> : vector<2x4x8xf32>
    %83 = tpu.matmul %82, %71, %cst_21 {dimension_numbers = #tpu.dot_dimension_numbers<[2], [1], [1], [2], [0, 0, 0, 1, 1, 2], [0], [0]>} : vector<2x4x8xf32>, vector<2x8x8xf32>, vector<2x4x8xf32> -> vector<2x4x8xf32>
    "tpu.trace_stop"() : () -> ()
    %84 = vector.extract_strided_slice %44 {offsets = [0, 0, 16], sizes = [2, 4, 8], strides = [1, 1, 1]} : vector<2x4x32xf32> to vector<2x4x8xf32>
    %85 = vector.extract_strided_slice %51 {offsets = [0, 0, 16], sizes = [2, 8, 8], strides = [1, 1, 1]} : vector<2x8x32xf32> to vector<2x8x8xf32>
    %86 = vector.extract_strided_slice %53 {offsets = [0, 0, 16], sizes = [2, 8, 8], strides = [1, 1, 1]} : vector<2x8x32xf32> to vector<2x8x8xf32>
    "tpu.trace_start"() <{level = 10 : i32, message = "btd,bpd->btp"}> : () -> ()
    %cst_22 = arith.constant dense<0.000000e+00> : vector<2x4x8xf32>
    %87 = tpu.matmul %84, %85, %cst_22 {dimension_numbers = #tpu.dot_dimension_numbers<[2], [2], [1], [1], [0, 0, 0, 1, 1, 1], [0], [0]>} : vector<2x4x8xf32>, vector<2x8x8xf32>, vector<2x4x8xf32> -> vector<2x4x8xf32>
    "tpu.trace_stop"() : () -> ()
    %cst_23 = arith.constant dense<0xFF800000> : vector<2x4xf32>
    %88 = vector.multi_reduction <maximumf>, %87, %cst_23 [2] : vector<2x4x8xf32> to vector<2x4xf32>
    %89 = vector.shape_cast %88 : vector<2x4xf32> to vector<2x4x1xf32>
    %90 = vector.broadcast %89 : vector<2x4x1xf32> to vector<2x4x8xf32>
    %91 = arith.subf %87, %90 : vector<2x4x8xf32>
    %92 = math.exp %91 : vector<2x4x8xf32>
    %cst_24 = arith.constant dense<0.000000e+00> : vector<2x4xf32>
    %93 = vector.multi_reduction <add>, %92, %cst_24 [2] : vector<2x4x8xf32> to vector<2x4xf32>
    %94 = vector.shape_cast %93 : vector<2x4xf32> to vector<2x4x1xf32>
    %95 = tpu.reciprocal %94 {approx = true} : vector<2x4x1xf32> -> vector<2x4x1xf32>
    %96 = vector.broadcast %95 : vector<2x4x1xf32> to vector<2x4x8xf32>
    %97 = arith.mulf %92, %96 : vector<2x4x8xf32>
    "tpu.trace_start"() <{level = 10 : i32, message = "btp,bpd->btd"}> : () -> ()
    %cst_25 = arith.constant dense<0.000000e+00> : vector<2x4x8xf32>
    %98 = tpu.matmul %97, %86, %cst_25 {dimension_numbers = #tpu.dot_dimension_numbers<[2], [1], [1], [2], [0, 0, 0, 1, 1, 2], [0], [0]>} : vector<2x4x8xf32>, vector<2x8x8xf32>, vector<2x4x8xf32> -> vector<2x4x8xf32>
    "tpu.trace_stop"() : () -> ()
    %99 = vector.extract_strided_slice %44 {offsets = [0, 0, 24], sizes = [2, 4, 8], strides = [1, 1, 1]} : vector<2x4x32xf32> to vector<2x4x8xf32>
    %100 = vector.extract_strided_slice %51 {offsets = [0, 0, 24], sizes = [2, 8, 8], strides = [1, 1, 1]} : vector<2x8x32xf32> to vector<2x8x8xf32>
    %101 = vector.extract_strided_slice %53 {offsets = [0, 0, 24], sizes = [2, 8, 8], strides = [1, 1, 1]} : vector<2x8x32xf32> to vector<2x8x8xf32>
    "tpu.trace_start"() <{level = 10 : i32, message = "btd,bpd->btp"}> : () -> ()
    %cst_26 = arith.constant dense<0.000000e+00> : vector<2x4x8xf32>
    %102 = tpu.matmul %99, %100, %cst_26 {dimension_numbers = #tpu.dot_dimension_numbers<[2], [2], [1], [1], [0, 0, 0, 1, 1, 1], [0], [0]>} : vector<2x4x8xf32>, vector<2x8x8xf32>, vector<2x4x8xf32> -> vector<2x4x8xf32>
    "tpu.trace_stop"() : () -> ()
    %cst_27 = arith.constant dense<0xFF800000> : vector<2x4xf32>
    %103 = vector.multi_reduction <maximumf>, %102, %cst_27 [2] : vector<2x4x8xf32> to vector<2x4xf32>
    %104 = vector.shape_cast %103 : vector<2x4xf32> to vector<2x4x1xf32>
    %105 = vector.broadcast %104 : vector<2x4x1xf32> to vector<2x4x8xf32>
    %106 = arith.subf %102, %105 : vector<2x4x8xf32>
    %107 = math.exp %106 : vector<2x4x8xf32>
    %cst_28 = arith.constant dense<0.000000e+00> : vector<2x4xf32>
    %108 = vector.multi_reduction <add>, %107, %cst_28 [2] : vector<2x4x8xf32> to vector<2x4xf32>
    %109 = vector.shape_cast %108 : vector<2x4xf32> to vector<2x4x1xf32>
    %110 = tpu.reciprocal %109 {approx = true} : vector<2x4x1xf32> -> vector<2x4x1xf32>
    %111 = vector.broadcast %110 : vector<2x4x1xf32> to vector<2x4x8xf32>
    %112 = arith.mulf %107, %111 : vector<2x4x8xf32>
    "tpu.trace_start"() <{level = 10 : i32, message = "btp,bpd->btd"}> : () -> ()
    %cst_29 = arith.constant dense<0.000000e+00> : vector<2x4x8xf32>
    %113 = tpu.matmul %112, %101, %cst_29 {dimension_numbers = #tpu.dot_dimension_numbers<[2], [1], [1], [2], [0, 0, 0, 1, 1, 2], [0], [0]>} : vector<2x4x8xf32>, vector<2x8x8xf32>, vector<2x4x8xf32> -> vector<2x4x8xf32>
    "tpu.trace_stop"() : () -> ()
    %114 = tpu.concatenate %67, %82, %97, %112 in 2 : vector<2x4x8xf32>, vector<2x4x8xf32>, vector<2x4x8xf32>, vector<2x4x8xf32> -> vector<2x4x32xf32>
    %c0_30 = arith.constant 0 : index
    %c0_31 = arith.constant 0 : index
    %c0_32 = arith.constant 0 : index
    %115 = vector.load %arg16[%c0_30, %c0_31, %c0_32] : memref<2x4x32xf32, #tpu.memory_space<vmem>>, vector<2x4x32xf32>
    tpu.vector_store %arg16[%c0_30, %c0_31, %c0_32], %114 {strides = array<i32>} : memref<2x4x32xf32, #tpu.memory_space<vmem>>, vector<2x4x32xf32>,
    %116 = tpu.concatenate %68, %83, %98, %113 in 2 : vector<2x4x8xf32>, vector<2x4x8xf32>, vector<2x4x8xf32>, vector<2x4x8xf32> -> vector<2x4x32xf32>
    %117 = vector.shape_cast %116 : vector<2x4x32xf32> to vector<8x32xf32>
    %118 = arith.addf %0, %117 : vector<8x32xf32>
    %cst_33 = arith.constant dense<0.000000e+00> : vector<8xf32>
    %119 = vector.multi_reduction <add>, %118, %cst_33 [1] : vector<8x32xf32> to vector<8xf32>
    %120 = vector.shape_cast %119 : vector<8xf32> to vector<8x1xf32>
    %cst_34 = arith.constant 3.200000e+01 : f32
    %121 = vector.broadcast %cst_34 : f32 to vector<8x1xf32>
    %122 = arith.divf %120, %121 : vector<8x1xf32>
    %123 = arith.mulf %118, %118 : vector<8x32xf32>
    %cst_35 = arith.constant dense<0.000000e+00> : vector<8xf32>
    %124 = vector.multi_reduction <add>, %123, %cst_35 [1] : vector<8x32xf32> to vector<8xf32>
    %125 = vector.shape_cast %124 : vector<8xf32> to vector<8x1xf32>
    %cst_36 = arith.constant 3.200000e+01 : f32
    %126 = vector.broadcast %cst_36 : f32 to vector<8x1xf32>
    %127 = arith.divf %125, %126 : vector<8x1xf32>
    %128 = vector.broadcast %122 : vector<8x1xf32> to vector<8x32xf32>
    %129 = arith.subf %118, %128 : vector<8x32xf32>
    %130 = arith.mulf %122, %122 : vector<8x1xf32>
    %131 = arith.subf %127, %130 : vector<8x1xf32>
    %cst_37 = arith.constant 9.99999974E-6 : f32
    %132 = vector.broadcast %cst_37 : f32 to vector<8x1xf32>
    %133 = arith.addf %131, %132 : vector<8x1xf32>
    %134 = math.rsqrt %133 : vector<8x1xf32>
    %135 = vector.broadcast %134 : vector<8x1xf32> to vector<8x32xf32>
    %136 = arith.mulf %129, %135 : vector<8x32xf32>
    %c0_38 = arith.constant 0 : index
    %c0_39 = arith.constant 0 : index
    %137 = vector.load %arg11[%c0_38, %c0_39] : memref<1x32xf32, #tpu.memory_space<vmem>>, vector<1x32xf32>
    %138 = vector.broadcast %137 : vector<1x32xf32> to vector<8x32xf32>
    %139 = arith.mulf %136, %138 : vector<8x32xf32>
    %c0_40 = arith.constant 0 : index
    %c0_41 = arith.constant 0 : index
    %140 = vector.load %arg12[%c0_40, %c0_41] : memref<1x32xf32, #tpu.memory_space<vmem>>, vector<1x32xf32>
    %141 = vector.broadcast %140 : vector<1x32xf32> to vector<8x32xf32>
    %142 = arith.addf %139, %141 : vector<8x32xf32>
    %c0_42 = arith.constant 0 : index
    %c0_43 = arith.constant 0 : index
    %143 = vector.load %arg7[%c0_42, %c0_43] : memref<32x128xf32, #tpu.memory_space<vmem>>, vector<32x128xf32>
    %cst_44 = arith.constant dense<0.000000e+00> : vector<8x128xf32>
    %144 = tpu.matmul %142, %143, %cst_44 {dimension_numbers = #tpu.dot_dimension_numbers<[1], [0], [0], [1], [0, 0, 1, 1], [], []>} : vector<8x32xf32>, vector<32x128xf32>, vector<8x128xf32> -> vector<8x128xf32>
    %c0_45 = arith.constant 0 : index
    %c0_46 = arith.constant 0 : index
    %145 = vector.load %arg8[%c0_45, %c0_46] : memref<1x128xf32, #tpu.memory_space<vmem>>, vector<1x128xf32>
    %146 = vector.broadcast %145 : vector<1x128xf32> to vector<8x128xf32>
    %147 = arith.addf %144, %146 : vector<8x128xf32>
    %cst_47 = arith.constant 0.000000e+00 : f32
    %148 = vector.broadcast %cst_47 : f32 to vector<8x128xf32>
    %149 = arith.maximumf %147, %148 : vector<8x128xf32>
    %c0_48 = arith.constant 0 : index
    %c0_49 = arith.constant 0 : index
    %150 = vector.load %arg9[%c0_48, %c0_49] : memref<128x32xf32, #tpu.memory_space<vmem>>, vector<128x32xf32>
    %cst_50 = arith.constant dense<0.000000e+00> : vector<8x32xf32>
    %151 = tpu.matmul %149, %150, %cst_50 {dimension_numbers = #tpu.dot_dimension_numbers<[1], [0], [0], [1], [0, 0, 1, 1], [], []>} : vector<8x128xf32>, vector<128x32xf32>, vector<8x32xf32> -> vector<8x32xf32>
    %c0_51 = arith.constant 0 : index
    %c0_52 = arith.constant 0 : index
    %152 = vector.load %arg10[%c0_51, %c0_52] : memref<1x32xf32, #tpu.memory_space<vmem>>, vector<1x32xf32>
    %153 = vector.broadcast %152 : vector<1x32xf32> to vector<8x32xf32>
    %154 = arith.addf %151, %153 : vector<8x32xf32>
    %155 = arith.addf %142, %154 : vector<8x32xf32>
    %cst_53 = arith.constant dense<0.000000e+00> : vector<8xf32>
    %156 = vector.multi_reduction <add>, %155, %cst_53 [1] : vector<8x32xf32> to vector<8xf32>
    %157 = vector.shape_cast %156 : vector<8xf32> to vector<8x1xf32>
    %cst_54 = arith.constant 3.200000e+01 : f32
    %158 = vector.broadcast %cst_54 : f32 to vector<8x1xf32>
    %159 = arith.divf %157, %158 : vector<8x1xf32>
    %160 = arith.mulf %155, %155 : vector<8x32xf32>
    %cst_55 = arith.constant dense<0.000000e+00> : vector<8xf32>
    %161 = vector.multi_reduction <add>, %160, %cst_55 [1] : vector<8x32xf32> to vector<8xf32>
    %162 = vector.shape_cast %161 : vector<8xf32> to vector<8x1xf32>
    %cst_56 = arith.constant 3.200000e+01 : f32
    %163 = vector.broadcast %cst_56 : f32 to vector<8x1xf32>
    %164 = arith.divf %162, %163 : vector<8x1xf32>
    %165 = vector.broadcast %159 : vector<8x1xf32> to vector<8x32xf32>
    %166 = arith.subf %155, %165 : vector<8x32xf32>
    %167 = arith.mulf %159, %159 : vector<8x1xf32>
    %168 = arith.subf %164, %167 : vector<8x1xf32>
    %cst_57 = arith.constant 9.99999974E-6 : f32
    %169 = vector.broadcast %cst_57 : f32 to vector<8x1xf32>
    %170 = arith.addf %168, %169 : vector<8x1xf32>
    %171 = math.rsqrt %170 : vector<8x1xf32>
    %172 = vector.broadcast %171 : vector<8x1xf32> to vector<8x32xf32>
    %173 = arith.mulf %166, %172 : vector<8x32xf32>
    %c0_58 = arith.constant 0 : index
    %c0_59 = arith.constant 0 : index
    %174 = vector.load %arg13[%c0_58, %c0_59] : memref<1x32xf32, #tpu.memory_space<vmem>>, vector<1x32xf32>
    %175 = vector.broadcast %174 : vector<1x32xf32> to vector<8x32xf32>
    %176 = arith.mulf %173, %175 : vector<8x32xf32>
    %c0_60 = arith.constant 0 : index
    %c0_61 = arith.constant 0 : index
    %177 = vector.load %arg14[%c0_60, %c0_61] : memref<1x32xf32, #tpu.memory_space<vmem>>, vector<1x32xf32>
    %178 = vector.broadcast %177 : vector<1x32xf32> to vector<8x32xf32>
    %179 = arith.addf %176, %178 : vector<8x32xf32>
    %c0_62 = arith.constant 0 : index
    %c0_63 = arith.constant 0 : index
    %180 = vector.load %arg15[%c0_62, %c0_63] : memref<8x32xf32, #tpu.memory_space<vmem>>, vector<8x32xf32>
    tpu.vector_store %arg15[%c0_62, %c0_63], %179 {strides = array<i32>} : memref<8x32xf32, #tpu.memory_space<vmem>>, vector<8x32xf32>,
    return
  }
  func.func @transform_0(%arg0: i32) -> (i32, i32) {
    %c0_i32 = arith.constant 0 : i32
    %c0_i32_0 = arith.constant 0 : i32
    return %arg0, %c0_i32 : i32, i32
  }
  func.func @transform_1(%arg0: i32) -> (i32, i32) {
    %c0_i32 = arith.constant 0 : i32
    %c0_i32_0 = arith.constant 0 : i32
    return %arg0, %c0_i32 : i32, i32
  }
  func.func @transform_2(%arg0: i32) -> (i32, i32) {
    %c0_i32 = arith.constant 0 : i32
    %c0_i32_0 = arith.constant 0 : i32
    %c0_i32_1 = arith.constant 0 : i32
    return %c0_i32, %c0_i32_0 : i32, i32
  }
  func.func @transform_3(%arg0: i32) -> (i32, i32) {
    %c0_i32 = arith.constant 0 : i32
    %c0_i32_0 = arith.constant 0 : i32
    %c0_i32_1 = arith.constant 0 : i32
    return %c0_i32, %c0_i32_0 : i32, i32
  }
  func.func @transform_4(%arg0: i32) -> (i32, i32) {
    %c0_i32 = arith.constant 0 : i32
    %c0_i32_0 = arith.constant 0 : i32
    %c0_i32_1 = arith.constant 0 : i32
    return %c0_i32, %c0_i32_0 : i32, i32
  }
  func.func @transform_5(%arg0: i32) -> (i32, i32) {
    %c0_i32 = arith.constant 0 : i32
    %c0_i32_0 = arith.constant 0 : i32
    %c0_i32_1 = arith.constant 0 : i32
    return %c0_i32, %c0_i32_0 : i32, i32
  }
  func.func @transform_6(%arg0: i32) -> (i32, i32) {
    %c0_i32 = arith.constant 0 : i32
    %c0_i32_0 = arith.constant 0 : i32
    %c0_i32_1 = arith.constant 0 : i32
    return %c0_i32, %c0_i32_0 : i32, i32
  }
  func.func @transform_7(%arg0: i32) -> (i32, i32) {
    %c0_i32 = arith.constant 0 : i32
    %c0_i32_0 = arith.constant 0 : i32
    %c0_i32_1 = arith.constant 0 : i32
    return %c0_i32, %c0_i32_0 : i32, i32
  }
  func.func @transform_8(%arg0: i32) -> (i32, i32) {
    %c0_i32 = arith.constant 0 : i32
    %c0_i32_0 = arith.constant 0 : i32
    %c0_i32_1 = arith.constant 0 : i32
    return %c0_i32, %c0_i32_0 : i32, i32
  }
  func.func @transform_9(%arg0: i32) -> (i32, i32) {
    %c0_i32 = arith.constant 0 : i32
    %c0_i32_0 = arith.constant 0 : i32
    %c0_i32_1 = arith.constant 0 : i32
    return %c0_i32, %c0_i32_0 : i32, i32
  }
  func.func @transform_10(%arg0: i32) -> (i32, i32) {
    %c0_i32 = arith.constant 0 : i32
    %c0_i32_0 = arith.constant 0 : i32
    %c0_i32_1 = arith.constant 0 : i32
    return %c0_i32, %c0_i32_0 : i32, i32
  }
  func.func @transform_11(%arg0: i32) -> (i32, i32) {
    %c0_i32 = arith.constant 0 : i32
    %c0_i32_0 = arith.constant 0 : i32
    %c0_i32_1 = arith.constant 0 : i32
    return %c0_i32, %c0_i32_0 : i32, i32
  }
  func.func @transform_12(%arg0: i32) -> (i32, i32) {
    %c0_i32 = arith.constant 0 : i32
    %c0_i32_0 = arith.constant 0 : i32
    %c0_i32_1 = arith.constant 0 : i32
    return %c0_i32, %c0_i32_0 : i32, i32
  }
  func.func @transform_13(%arg0: i32) -> (i32, i32) {
    %c0_i32 = arith.constant 0 : i32
    %c0_i32_0 = arith.constant 0 : i32
    %c0_i32_1 = arith.constant 0 : i32
    return %c0_i32, %c0_i32_0 : i32, i32
  }
  func.func @transform_14(%arg0: i32) -> (i32, i32) {
    %c0_i32 = arith.constant 0 : i32
    %c0_i32_0 = arith.constant 0 : i32
    return %arg0, %c0_i32 : i32, i32
  }
  func.func @transform_15(%arg0: i32) -> (i32, i32, i32) {
    %c0_i32 = arith.constant 0 : i32
    %c0_i32_0 = arith.constant 0 : i32
    %c0_i32_1 = arith.constant 0 : i32
    return %arg0, %c0_i32, %c0_i32_0 : i32, i32, i32
  }
}

</mosaic_0001>

<llo_original>
// kernel: tpu_custom_call.1
$region0: #{tpu_custom_call.1}
  #allocation0 [shape = 'u32[]', space=smem, size = 0x4, offset = 0x4, fixed_abs, tag = 'smem constant byte address 0x4 - core index']
  #allocation1 [shape = 'u32[72,128]{1,0:T(1,128)}', space=vmem, size = 0x9000, scoped, tag = 'internal scratch']
  %s0 = inlined_call_operand.vmem [shape: f32[8,32], index: 0, kind: input, shape index: {}]
  %s1 = inlined_call_operand.vmem [shape: f32[16,16], index: 1, kind: input, shape index: {}]
  %s2 = inlined_call_operand.vmem [shape: f32[32,128], index: 2, kind: input, shape index: {}]
  %s3 = inlined_call_operand.vmem [shape: f32[8,32], index: 3, kind: input, shape index: {}]
  %s4 = inlined_call_operand.vmem [shape: f32[16,64], index: 4, kind: input, shape index: {}]
  %s5 = inlined_call_operand.vmem [shape: f32[1,64], index: 5, kind: input, shape index: {}]
  %s6 = inlined_call_operand.vmem [shape: f32[32,128], index: 6, kind: input, shape index: {}]
  %s7 = inlined_call_operand.vmem [shape: f32[1,128], index: 7, kind: input, shape index: {}]
  %s8 = inlined_call_operand.vmem [shape: f32[128,32], index: 8, kind: input, shape index: {}]
  %s9 = inlined_call_operand.vmem [shape: f32[1,32], index: 9, kind: input, shape index: {}]
  %s10 = inlined_call_operand.vmem [shape: f32[1,32], index: 10, kind: input, shape index: {}]
  %s11 = inlined_call_operand.vmem [shape: f32[1,32], index: 11, kind: input, shape index: {}]
  %s12 = inlined_call_operand.vmem [shape: f32[1,32], index: 12, kind: input, shape index: {}]
  %s13 = inlined_call_operand.vmem [shape: f32[1,32], index: 13, kind: input, shape index: {}]
  %s14 = inlined_call_operand.hbm [shape: f32[8,32], index: 14, kind: output, shape index: {0}]
  %s15 = inlined_call_operand.hbm [shape: f32[2,4,32], index: 15, kind: output, shape index: {1}]
  %16 = xla_tuple %s14, %s15
  %s17 = sld [smem:[#allocation0]]
  $region74: #{tpu_custom_call.1} parent=0
    _
  %s19 = ssub.s32 1, %s17
  %s20 = scalar_select 0, %s19, %s17
  $region1: #{tpu_custom_call.1} parent=0
    #allocation2 [shape = 'u8[4096]{0}', space=vmem, size = 0x1000, scoped, tag = 'output window, operand 0, single buffered']
    #allocation3 [shape = 's32[1]{0}', space=sflag, size = 0x4, scoped, tag = 'scoped memory for tpu_custom_call.1']
    #allocation4 [shape = 'u8[4096]{0}', space=vmem, size = 0x1000, scoped, tag = 'output window, operand 1, single buffered']
    #allocation5 [shape = 's32[1]{0}', space=sflag, size = 0x4, scoped, tag = 'scoped memory for tpu_custom_call.1']
    %21 = vsyncpa [#allocation3], 0
    %22 = vsyncpa [#allocation5], 0
    // Predicated region
    $region2: #{tpu_custom_call.1} parent=1 // pred_check
      _
    $region3: #{tpu_custom_call.1} parent=1 // pred_check_branch
      %24 = sbr.rel (0) target = $region5
    $region4: #{tpu_custom_call.1} parent=1 // pred_region
      _
    $region5: #{tpu_custom_call.1} parent=1 // pred_fallthru
      _
    // Predicated region
    $region6: #{tpu_custom_call.1} parent=1 // pred_check
      _
    $region7: #{tpu_custom_call.1} parent=1 // pred_check_branch
      %26 = sbr.rel (0) target = $region9
    $region8: #{tpu_custom_call.1} parent=1 // pred_region
      _
    $region9: #{tpu_custom_call.1} parent=1 // pred_fallthru
      _
    // Predicated region
    $region10: #{tpu_custom_call.1} parent=1 // pred_check
      _
    $region11: #{tpu_custom_call.1} parent=1 // pred_check_branch
      %28 = sbr.rel (0) target = $region13
    $region12: #{tpu_custom_call.1} parent=1 // pred_region
      _
    $region13: #{tpu_custom_call.1} parent=1 // pred_fallthru
      _
    // Predicated region
    $region14: #{tpu_custom_call.1} parent=1 // pred_check
      _
    $region15: #{tpu_custom_call.1} parent=1 // pred_check_branch
      %30 = sbr.rel (0) target = $region17
    $region16: #{tpu_custom_call.1} parent=1 // pred_region
      _
    $region17: #{tpu_custom_call.1} parent=1 // pred_fallthru
      _
    // Predicated region
    $region18: #{tpu_custom_call.1} parent=1 // pred_check
      _
    $region19: #{tpu_custom_call.1} parent=1 // pred_check_branch
      %32 = sbr.rel (0) target = $region21
    $region20: #{tpu_custom_call.1} parent=1 // pred_region
      _
    $region21: #{tpu_custom_call.1} parent=1 // pred_fallthru
      _
    // Predicated region
    $region22: #{tpu_custom_call.1} parent=1 // pred_check
      _
    $region23: #{tpu_custom_call.1} parent=1 // pred_check_branch
      %34 = sbr.rel (0) target = $region25
    $region24: #{tpu_custom_call.1} parent=1 // pred_region
      _
    $region25: #{tpu_custom_call.1} parent=1 // pred_fallthru
      _
    // Predicated region
    $region26: #{tpu_custom_call.1} parent=1 // pred_check
      _
    $region27: #{tpu_custom_call.1} parent=1 // pred_check_branch
      %36 = sbr.rel (0) target = $region29
    $region28: #{tpu_custom_call.1} parent=1 // pred_region
      _
    $region29: #{tpu_custom_call.1} parent=1 // pred_fallthru
      _
    // Predicated region
    $region30: #{tpu_custom_call.1} parent=1 // pred_check
      _
    $region31: #{tpu_custom_call.1} parent=1 // pred_check_branch
      %38 = sbr.rel (0) target = $region33
    $region32: #{tpu_custom_call.1} parent=1 // pred_region
      _
    $region33: #{tpu_custom_call.1} parent=1 // pred_fallthru
      _
    // Predicated region
    $region34: #{tpu_custom_call.1} parent=1 // pred_check
      _
    $region35: #{tpu_custom_call.1} parent=1 // pred_check_branch
      %40 = sbr.rel (0) target = $region37
    $region36: #{tpu_custom_call.1} parent=1 // pred_region
      _
    $region37: #{tpu_custom_call.1} parent=1 // pred_fallthru
      _
    // Predicated region
    $region38: #{tpu_custom_call.1} parent=1 // pred_check
      _
    $region39: #{tpu_custom_call.1} parent=1 // pred_check_branch
      %42 = sbr.rel (0) target = $region41
    $region40: #{tpu_custom_call.1} parent=1 // pred_region
      _
    $region41: #{tpu_custom_call.1} parent=1 // pred_fallthru
      _
    // Predicated region
    $region42: #{tpu_custom_call.1} parent=1 // pred_check
      _
    $region43: #{tpu_custom_call.1} parent=1 // pred_check_branch
      %44 = sbr.rel (0) target = $region45
    $region44: #{tpu_custom_call.1} parent=1 // pred_region
      _
    $region45: #{tpu_custom_call.1} parent=1 // pred_fallthru
      _
    // Predicated region
    $region46: #{tpu_custom_call.1} parent=1 // pred_check
      _
    $region47: #{tpu_custom_call.1} parent=1 // pred_check_branch
      %46 = sbr.rel (0) target = $region49
    $region48: #{tpu_custom_call.1} parent=1 // pred_region
      _
    $region49: #{tpu_custom_call.1} parent=1 // pred_fallthru
      _
    // Predicated region
    $region50: #{tpu_custom_call.1} parent=1 // pred_check
      _
    $region51: #{tpu_custom_call.1} parent=1 // pred_check_branch
      %48 = sbr.rel (0) target = $region53
    $region52: #{tpu_custom_call.1} parent=1 // pred_region
      _
    $region53: #{tpu_custom_call.1} parent=1 // pred_fallthru
      _
    // Predicated region
    $region54: #{tpu_custom_call.1} parent=1 // pred_check
      _
    $region55: #{tpu_custom_call.1} parent=1 // pred_check_branch
      %50 = sbr.rel (0) target = $region57
    $region56: #{tpu_custom_call.1} parent=1 // pred_region
      _
    $region57: #{tpu_custom_call.1} parent=1 // pred_fallthru
      _
    %v51 = vld [vmem:[%s0] sm:$0xff]
    %v52 = vld [vmem:[%s1] sm:$0xff]
    %v53 = vld [vmem:[%s1 + $0x8] sm:$0xff]
    %v54 = vld [vmem:[%s2] sm:$0xff]
    %v55 = vld [vmem:[%s2 + $0x8] sm:$0xff]
    %v56 = vld [vmem:[%s2 + $0x10] sm:$0xff]
    %v57 = vld [vmem:[%s2 + $0x18] sm:$0xff]
    %vm58 = vcmask 261120
    %v60 = vsel %vm58, %v51, 0
    %62 = vmatpush.msra.mxu0 0.0
    %63 = vmatpush.msra.mxu0 0.0
    %64 = vmatpush.msra.mxu0 0.0
    %65 = vmatpush.msra.mxu0 0.0
    %66 = vmatpush.msra.mxu0 0.0
    %67 = vmatpush.msra.mxu0 0.0
    %68 = vmatpush.msra.mxu0 0.0
    %69 = vmatpush.msra.mxu0 0.0
    %70 = vmatpush.msra.mxu0 0.0
    %71 = vmatpush.msra.mxu0 0.0
    %72 = vmatpush.msra.mxu0 0.0
    %73 = vmatpush.msra.mxu0 0.0
    %74 = vmatpush.msra.mxu0 %v57
    %75 = vmatpush.msra.mxu0 %v56
    %76 = vmatpush.msra.mxu0 %v55
    %77 = vmatpush.msra.mxu0 %v54
    %78 = vmatmul.f32.gmra.mxu0 %v60
    %v79 = vpop.f32.mrf.mxu0
    %v80 = vadd.f32 0.0, %v79
    %81 = vdwg.mxu0
    %v82 = vlaneseq
    %v83 = vshrl.u32 %v82, 7
    %vm84 = vcmp.lt.s32.totalorder %v83, 0
    %v85 = vsub.s32 0, %v83
    %v86 = vsel %vm84, %v85, %v83
    %v87 = vshrl.u32 %v86, 2
    %v88 = vand.u32 %v86, 3
    %v89 = vsub.s32 0, %v88
    %v90 = vsel %vm84, %v89, %v88
    %vm91 = vcmp.eq.s32.totalorder %v90, 0
    %v92 = vsel %vm91, 1, 0
    %v93 = vcvt.s32.f32 %v92
    %v94 = vmul.f32 %v80, %v93
    %v95 = vadd.f32 %v94, 0.0
    %vm96 = vcmp.eq.s32.totalorder %v90, 1
    %v97 = vsel %vm96, 1, 0
    %v98 = vcvt.s32.f32 %v97
    %v99 = vmul.f32 %v80, %v98
    %101 = vrot.lane.b32.xlu0 %v99, 96
    %v102 = vpop.permute.xlu0 %101
    %v104 = vadd.f32 %v95, %v102
    %vm105 = vcmp.eq.s32.totalorder %v90, 2
    %v106 = vsel %vm105, 1, 0
    %v107 = vcvt.s32.f32 %v106
    %v108 = vmul.f32 %v80, %v107
    %110 = vrot.lane.b32.xlu0 %v108, 64
    %v111 = vpop.permute.xlu0 %110
    %v113 = vadd.f32 %v104, %v111
    %vm114 = vcmp.eq.s32.totalorder %v90, 3
    %v115 = vsel %vm114, 1, 0
    %v116 = vcvt.s32.f32 %v115
    %v117 = vmul.f32 %v80, %v116
    %119 = vrot.lane.b32.xlu0 %v117, 32
    %v120 = vpop.permute.xlu0 %119
    %v122 = vadd.f32 %v113, %v120
    %v123 = vld [vmem:[%s3] sm:$0xff]
    %v124 = vadd.f32 %v122, %v123
    %v125 = vmul.f32 %v124, 0.35355338
    %v127 = vrot.slane %v125, 4
    %v128 = vld [vmem:[%s4] sm:$0xff]
    %v129 = vld [vmem:[%s4 + $0x8] sm:$0xff]
    %v130 = vld [vmem:[%s5] sm:$0x1]
    %v132 = vperm.slane %v130, 0
    %vm134 = vcmask 130048
    %v136 = vsel %vm134, %v52, 0
    %v139 = vsel %vm134, %v53, 0
    %141 = vmatpush.msra.mxu0 0.0
    %142 = vmatpush.msra.mxu0 0.0
    %143 = vmatpush.msra.mxu0 0.0
    %144 = vmatpush.msra.mxu0 0.0
    %145 = vmatpush.msra.mxu0 0.0
    %146 = vmatpush.msra.mxu0 0.0
    %147 = vmatpush.msra.mxu0 0.0
    %148 = vmatpush.msra.mxu0 0.0
    %149 = vmatpush.msra.mxu0 0.0
    %150 = vmatpush.msra.mxu0 0.0
    %151 = vmatpush.msra.mxu0 0.0
    %152 = vmatpush.msra.mxu0 0.0
    %153 = vmatpush.msra.mxu0 0.0
    %154 = vmatpush.msra.mxu0 0.0
    %155 = vmatpush.msra.mxu0 %v129
    %156 = vmatpush.msra.mxu0 %v128
    %157 = vmatmul.f32.gmra.mxu0 %v136
    %v158 = vpop.f32.mrf.mxu0
    %v159 = vadd.f32 %v132, %v158
    %160 = vmatmul.f32.gmra.mxu0 %v139
    %v161 = vpop.f32.mrf.mxu0
    %v162 = vadd.f32 %v132, %v161
    %163 = vdwg.mxu0
    %vm164 = vcmask 64512
    %v165 = vsel %vm164, %v125, 0
    %v168 = vsel %vm164, %v159, 0
    %170 = vmatpush.xpose.msra.mxu0 0.0
    %171 = vmatpush.xpose.msra.mxu0 0.0
    %172 = vmatpush.xpose.msra.mxu0 0.0
    %173 = vmatpush.xpose.msra.mxu0 0.0
    %174 = vmatpush.xpose.msra.mxu0 0.0
    %175 = vmatpush.xpose.msra.mxu0 0.0
    %176 = vmatpush.xpose.msra.mxu0 0.0
    %177 = vmatpush.xpose.msra.mxu0 0.0
    %178 = vmatpush.xpose.msra.mxu0 0.0
    %179 = vmatpush.xpose.msra.mxu0 0.0
    %180 = vmatpush.xpose.msra.mxu0 0.0
    %181 = vmatpush.xpose.msra.mxu0 0.0
    %182 = vmatpush.xpose.msra.mxu0 0.0
    %183 = vmatpush.xpose.msra.mxu0 0.0
    %184 = vmatpush.xpose.msra.mxu0 0.0
    %185 = vmatpush.xpose.msra.mxu0 %v168
    %186 = vmatmul.f32.gmra.mxu0 %v165
    %v187 = vpop.f32.mrf.mxu0
    %v188 = vadd.f32 0.0, %v187
    %189 = vdwg.mxu0
    %v190 = vsel %vm164, %v127, 0
    %v193 = vsel %vm164, %v162, 0
    %195 = vmatpush.xpose.msra.mxu0 0.0
    %196 = vmatpush.xpose.msra.mxu0 0.0
    %197 = vmatpush.xpose.msra.mxu0 0.0
    %198 = vmatpush.xpose.msra.mxu0 0.0
    %199 = vmatpush.xpose.msra.mxu0 0.0
    %200 = vmatpush.xpose.msra.mxu0 0.0
    %201 = vmatpush.xpose.msra.mxu0 0.0
    %202 = vmatpush.xpose.msra.mxu0 0.0
    %203 = vmatpush.xpose.msra.mxu0 0.0
    %204 = vmatpush.xpose.msra.mxu0 0.0
    %205 = vmatpush.xpose.msra.mxu0 0.0
    %206 = vmatpush.xpose.msra.mxu0 0.0
    %207 = vmatpush.xpose.msra.mxu0 0.0
    %208 = vmatpush.xpose.msra.mxu0 0.0
    %209 = vmatpush.xpose.msra.mxu0 0.0
    %210 = vmatpush.xpose.msra.mxu0 %v193
    %211 = vmatmul.f32.gmra.mxu0 %v190
    %v212 = vpop.f32.mrf.mxu0
    %v213 = vadd.f32 0.0, %v212
    %214 = vdwg.mxu0
    %vm215 = vcmask 60416
    %v216 = vsel %vm215, %v188, -inf
    %217 = vmax.xlane.f32.xlu0 %v216
    %v218 = vpop.xlane.xlu0 %217
    %v219 = vsel %vm215, %v213, -inf
    %220 = vmax.xlane.f32.xlu0 %v219
    %v221 = vpop.xlane.xlu0 %220
    %v222 = vsub.f32 %v188, %v218
    %v223 = vsub.f32 %v213, %v221
    %v224 = vmul.f32 %v222, 1.442695
    %v225 = vpow.pop %v224
    %v226 = vmul.f32 %v223, 1.442695
    %v227 = vpow.pop %v226
    %v228 = vsel %vm215, %v225, 0.0
    %229 = vadd.xlane.f32.xlu0 %v228
    %v230 = vpop.xlane.xlu0 %229
    %v231 = vsel %vm215, %v227, 0.0
    %232 = vadd.xlane.f32.xlu0 %v231
    %v233 = vpop.xlane.xlu0 %232
    %v234 = vrcp.pop %v230
    %v235 = vrcp.pop %v233
    %v236 = vmul.f32 %v225, %v234
    %v237 = vmul.f32 %v227, %v235
    %238 = vrot.lane.b32.xlu0 %v159, 96
    %v239 = vpop.permute.xlu0 %238
    %v242 = vsel %vm164, %v236, 0
    %244 = vmatpush.msra.mxu0 0.0
    %245 = vmatpush.msra.mxu0 0.0
    %246 = vmatpush.msra.mxu0 0.0
    %247 = vmatpush.msra.mxu0 0.0
    %248 = vmatpush.msra.mxu0 0.0
    %249 = vmatpush.msra.mxu0 0.0
    %250 = vmatpush.msra.mxu0 0.0
    %251 = vmatpush.msra.mxu0 0.0
    %252 = vmatpush.msra.mxu0 0.0
    %253 = vmatpush.msra.mxu0 0.0
    %254 = vmatpush.msra.mxu0 0.0
    %255 = vmatpush.msra.mxu0 0.0
    %256 = vmatpush.msra.mxu0 0.0
    %257 = vmatpush.msra.mxu0 0.0
    %258 = vmatpush.msra.mxu0 0.0
    %259 = vmatpush.msra.mxu0 %v239
    %260 = vmatmul.f32.gmra.mxu0 %v242
    %v261 = vpop.f32.mrf.mxu0
    %v262 = vadd.f32 0.0, %v261
    %263 = vdwg.mxu0
    %264 = vrot.lane.b32.xlu0 %v162, 96
    %v265 = vpop.permute.xlu0 %264
    %v268 = vsel %vm164, %v237, 0
    %270 = vmatpush.msra.mxu0 0.0
    %271 = vmatpush.msra.mxu0 0.0
    %272 = vmatpush.msra.mxu0 0.0
    %273 = vmatpush.msra.mxu0 0.0
    %274 = vmatpush.msra.mxu0 0.0
    %275 = vmatpush.msra.mxu0 0.0
    %276 = vmatpush.msra.mxu0 0.0
    %277 = vmatpush.msra.mxu0 0.0
    %278 = vmatpush.msra.mxu0 0.0
    %279 = vmatpush.msra.mxu0 0.0
    %280 = vmatpush.msra.mxu0 0.0
    %281 = vmatpush.msra.mxu0 0.0
    %282 = vmatpush.msra.mxu0 0.0
    %283 = vmatpush.msra.mxu0 0.0
    %284 = vmatpush.msra.mxu0 0.0
    %285 = vmatpush.msra.mxu0 %v265
    %286 = vmatmul.f32.gmra.mxu0 %v268
    %v287 = vpop.f32.mrf.mxu0
    %v288 = vadd.f32 0.0, %v287
    %289 = vdwg.mxu0
    %290 = vst [vmem:[#allocation1] ss:$2 sm:$0xff] %v125
    %v291 = vld.sshfl [vmem:[#allocation1] sm:$0xff pattern:$0x75316420]
    %292 = vrot.lane.b32.xlu0 %v291, 120
    %v293 = vpop.permute.xlu0 %292
    %294 = vrot.lane.b32.xlu0 %v159, 120
    %v295 = vpop.permute.xlu0 %294
    %v296 = vsel %vm164, %v293, 0
    %v298 = vsel %vm164, %v295, 0
    %300 = vmatpush.xpose.msra.mxu0 0.0
    %301 = vmatpush.xpose.msra.mxu0 0.0
    %302 = vmatpush.xpose.msra.mxu0 0.0
    %303 = vmatpush.xpose.msra.mxu0 0.0
    %304 = vmatpush.xpose.msra.mxu0 0.0
    %305 = vmatpush.xpose.msra.mxu0 0.0
    %306 = vmatpush.xpose.msra.mxu0 0.0
    %307 = vmatpush.xpose.msra.mxu0 0.0
    %308 = vmatpush.xpose.msra.mxu0 0.0
    %309 = vmatpush.xpose.msra.mxu0 0.0
    %310 = vmatpush.xpose.msra.mxu0 0.0
    %311 = vmatpush.xpose.msra.mxu0 0.0
    %312 = vmatpush.xpose.msra.mxu0 0.0
    %313 = vmatpush.xpose.msra.mxu0 0.0
    %314 = vmatpush.xpose.msra.mxu0 0.0
    %315 = vmatpush.xpose.msra.mxu0 %v298
    %316 = vmatmul.f32.gmra.mxu0 %v296
    %v317 = vpop.f32.mrf.mxu0
    %v318 = vadd.f32 0.0, %v317
    %319 = vdwg.mxu0
    %320 = vst [vmem:[#allocation1] ss:$2 sm:$0xff] %v127
    %v321 = vld.sshfl [vmem:[#allocation1] sm:$0xff pattern:$0x75316420]
    %322 = vrot.lane.b32.xlu0 %v321, 120
    %v323 = vpop.permute.xlu0 %322
    %324 = vrot.lane.b32.xlu0 %v162, 120
    %v325 = vpop.permute.xlu0 %324
    %v326 = vsel %vm164, %v323, 0
    %v328 = vsel %vm164, %v325, 0
    %330 = vmatpush.xpose.msra.mxu0 0.0
    %331 = vmatpush.xpose.msra.mxu0 0.0
    %332 = vmatpush.xpose.msra.mxu0 0.0
    %333 = vmatpush.xpose.msra.mxu0 0.0
    %334 = vmatpush.xpose.msra.mxu0 0.0
    %335 = vmatpush.xpose.msra.mxu0 0.0
    %336 = vmatpush.xpose.msra.mxu0 0.0
    %337 = vmatpush.xpose.msra.mxu0 0.0
    %338 = vmatpush.xpose.msra.mxu0 0.0
    %339 = vmatpush.xpose.msra.mxu0 0.0
    %340 = vmatpush.xpose.msra.mxu0 0.0
    %341 = vmatpush.xpose.msra.mxu0 0.0
    %342 = vmatpush.xpose.msra.mxu0 0.0
    %343 = vmatpush.xpose.msra.mxu0 0.0
    %344 = vmatpush.xpose.msra.mxu0 0.0
    %345 = vmatpush.xpose.msra.mxu0 %v328
    %346 = vmatmul.f32.gmra.mxu0 %v326
    %v347 = vpop.f32.mrf.mxu0
    %v348 = vadd.f32 0.0, %v347
    %349 = vdwg.mxu0
    %v350 = vsel %vm215, %v318, -inf
    %351 = vmax.xlane.f32.xlu0 %v350
    %v352 = vpop.xlane.xlu0 %351
    %v353 = vsel %vm215, %v348, -inf
    %354 = vmax.xlane.f32.xlu0 %v353
    %v355 = vpop.xlane.xlu0 %354
    %v356 = vsub.f32 %v318, %v352
    %v357 = vsub.f32 %v348, %v355
    %v358 = vmul.f32 %v356, 1.442695
    %v359 = vpow.pop %v358
    %v360 = vmul.f32 %v357, 1.442695
    %v361 = vpow.pop %v360
    %v362 = vsel %vm215, %v359, 0.0
    %363 = vadd.xlane.f32.xlu0 %v362
    %v364 = vpop.xlane.xlu0 %363
    %v365 = vsel %vm215, %v361, 0.0
    %366 = vadd.xlane.f32.xlu0 %v365
    %v367 = vpop.xlane.xlu0 %366
    %v368 = vrcp.pop %v364
    %v369 = vrcp.pop %v367
    %v370 = vmul.f32 %v359, %v368
    %v371 = vmul.f32 %v361, %v369
    %372 = vrot.lane.b32.xlu0 %v159, 88
    %v373 = vpop.permute.xlu0 %372
    %v376 = vsel %vm164, %v370, 0
    %378 = vmatpush.msra.mxu0 0.0
    %379 = vmatpush.msra.mxu0 0.0
    %380 = vmatpush.msra.mxu0 0.0
    %381 = vmatpush.msra.mxu0 0.0
    %382 = vmatpush.msra.mxu0 0.0
    %383 = vmatpush.msra.mxu0 0.0
    %384 = vmatpush.msra.mxu0 0.0
    %385 = vmatpush.msra.mxu0 0.0
    %386 = vmatpush.msra.mxu0 0.0
    %387 = vmatpush.msra.mxu0 0.0
    %388 = vmatpush.msra.mxu0 0.0
    %389 = vmatpush.msra.mxu0 0.0
    %390 = vmatpush.msra.mxu0 0.0
    %391 = vmatpush.msra.mxu0 0.0
    %392 = vmatpush.msra.mxu0 0.0
    %393 = vmatpush.msra.mxu0 %v373
    %394 = vmatmul.f32.gmra.mxu0 %v376
    %v395 = vpop.f32.mrf.mxu0
    %v396 = vadd.f32 0.0, %v395
    %397 = vdwg.mxu0
    %398 = vrot.lane.b32.xlu0 %v162, 88
    %v399 = vpop.permute.xlu0 %398
    %v402 = vsel %vm164, %v371, 0
    %404 = vmatpush.msra.mxu0 0.0
    %405 = vmatpush.msra.mxu0 0.0
    %406 = vmatpush.msra.mxu0 0.0
    %407 = vmatpush.msra.mxu0 0.0
    %408 = vmatpush.msra.mxu0 0.0
    %409 = vmatpush.msra.mxu0 0.0
    %410 = vmatpush.msra.mxu0 0.0
    %411 = vmatpush.msra.mxu0 0.0
    %412 = vmatpush.msra.mxu0 0.0
    %413 = vmatpush.msra.mxu0 0.0
    %414 = vmatpush.msra.mxu0 0.0
    %415 = vmatpush.msra.mxu0 0.0
    %416 = vmatpush.msra.mxu0 0.0
    %417 = vmatpush.msra.mxu0 0.0
    %418 = vmatpush.msra.mxu0 0.0
    %419 = vmatpush.msra.mxu0 %v399
    %420 = vmatmul.f32.gmra.mxu0 %v402
    %v421 = vpop.f32.mrf.mxu0
    %v422 = vadd.f32 0.0, %v421
    %423 = vdwg.mxu0
    %424 = vst [vmem:[#allocation1] ss:$2 sm:$0xff] %v125
    %v425 = vld.sshfl [vmem:[#allocation1] sm:$0xff pattern:$0x75316420]
    %426 = vrot.lane.b32.xlu0 %v425, 112
    %v427 = vpop.permute.xlu0 %426
    %428 = vrot.lane.b32.xlu0 %v159, 112
    %v429 = vpop.permute.xlu0 %428
    %v430 = vsel %vm164, %v427, 0
    %v432 = vsel %vm164, %v429, 0
    %434 = vmatpush.xpose.msra.mxu0 0.0
    %435 = vmatpush.xpose.msra.mxu0 0.0
    %436 = vmatpush.xpose.msra.mxu0 0.0
    %437 = vmatpush.xpose.msra.mxu0 0.0
    %438 = vmatpush.xpose.msra.mxu0 0.0
    %439 = vmatpush.xpose.msra.mxu0 0.0
    %440 = vmatpush.xpose.msra.mxu0 0.0
    %441 = vmatpush.xpose.msra.mxu0 0.0
    %442 = vmatpush.xpose.msra.mxu0 0.0
    %443 = vmatpush.xpose.msra.mxu0 0.0
    %444 = vmatpush.xpose.msra.mxu0 0.0
    %445 = vmatpush.xpose.msra.mxu0 0.0
    %446 = vmatpush.xpose.msra.mxu0 0.0
    %447 = vmatpush.xpose.msra.mxu0 0.0
    %448 = vmatpush.xpose.msra.mxu0 0.0
    %449 = vmatpush.xpose.msra.mxu0 %v432
    %450 = vmatmul.f32.gmra.mxu0 %v430
    %v451 = vpop.f32.mrf.mxu0
    %v452 = vadd.f32 0.0, %v451
    %453 = vdwg.mxu0
    %454 = vst [vmem:[#allocation1] ss:$2 sm:$0xff] %v127
    %v455 = vld.sshfl [vmem:[#allocation1] sm:$0xff pattern:$0x75316420]
    %456 = vrot.lane.b32.xlu0 %v455, 112
    %v457 = vpop.permute.xlu0 %456
    %458 = vrot.lane.b32.xlu0 %v162, 112
    %v459 = vpop.permute.xlu0 %458
    %v460 = vsel %vm164, %v457, 0
    %v462 = vsel %vm164, %v459, 0
    %464 = vmatpush.xpose.msra.mxu0 0.0
    %465 = vmatpush.xpose.msra.mxu0 0.0
    %466 = vmatpush.xpose.msra.mxu0 0.0
    %467 = vmatpush.xpose.msra.mxu0 0.0
    %468 = vmatpush.xpose.msra.mxu0 0.0
    %469 = vmatpush.xpose.msra.mxu0 0.0
    %470 = vmatpush.xpose.msra.mxu0 0.0
    %471 = vmatpush.xpose.msra.mxu0 0.0
    %472 = vmatpush.xpose.msra.mxu0 0.0
    %473 = vmatpush.xpose.msra.mxu0 0.0
    %474 = vmatpush.xpose.msra.mxu0 0.0
    %475 = vmatpush.xpose.msra.mxu0 0.0
    %476 = vmatpush.xpose.msra.mxu0 0.0
    %477 = vmatpush.xpose.msra.mxu0 0.0
    %478 = vmatpush.xpose.msra.mxu0 0.0
    %479 = vmatpush.xpose.msra.mxu0 %v462
    %480 = vmatmul.f32.gmra.mxu0 %v460
    %v481 = vpop.f32.mrf.mxu0
    %v482 = vadd.f32 0.0, %v481
    %483 = vdwg.mxu0
    %v484 = vsel %vm215, %v452, -inf
    %485 = vmax.xlane.f32.xlu0 %v484
    %v486 = vpop.xlane.xlu0 %485
    %v487 = vsel %vm215, %v482, -inf
    %488 = vmax.xlane.f32.xlu0 %v487
    %v489 = vpop.xlane.xlu0 %488
    %v490 = vsub.f32 %v452, %v486
    %v491 = vsub.f32 %v482, %v489
    %v492 = vmul.f32 %v490, 1.442695
    %v493 = vpow.pop %v492
    %v494 = vmul.f32 %v491, 1.442695
    %v495 = vpow.pop %v494
    %v496 = vsel %vm215, %v493, 0.0
    %497 = vadd.xlane.f32.xlu0 %v496
    %v498 = vpop.xlane.xlu0 %497
    %v499 = vsel %vm215, %v495, 0.0
    %500 = vadd.xlane.f32.xlu0 %v499
    %v501 = vpop.xlane.xlu0 %500
    %v502 = vrcp.pop %v498
    %v503 = vrcp.pop %v501
    %v504 = vmul.f32 %v493, %v502
    %v505 = vmul.f32 %v495, %v503
    %506 = vrot.lane.b32.xlu0 %v159, 80
    %v507 = vpop.permute.xlu0 %506
    %v510 = vsel %vm164, %v504, 0
    %512 = vmatpush.msra.mxu0 0.0
    %513 = vmatpush.msra.mxu0 0.0
    %514 = vmatpush.msra.mxu0 0.0
    %515 = vmatpush.msra.mxu0 0.0
    %516 = vmatpush.msra.mxu0 0.0
    %517 = vmatpush.msra.mxu0 0.0
    %518 = vmatpush.msra.mxu0 0.0
    %519 = vmatpush.msra.mxu0 0.0
    %520 = vmatpush.msra.mxu0 0.0
    %521 = vmatpush.msra.mxu0 0.0
    %522 = vmatpush.msra.mxu0 0.0
    %523 = vmatpush.msra.mxu0 0.0
    %524 = vmatpush.msra.mxu0 0.0
    %525 = vmatpush.msra.mxu0 0.0
    %526 = vmatpush.msra.mxu0 0.0
    %527 = vmatpush.msra.mxu0 %v507
    %528 = vmatmul.f32.gmra.mxu0 %v510
    %v529 = vpop.f32.mrf.mxu0
    %v530 = vadd.f32 0.0, %v529
    %531 = vdwg.mxu0
    %532 = vrot.lane.b32.xlu0 %v162, 80
    %v533 = vpop.permute.xlu0 %532
    %v536 = vsel %vm164, %v505, 0
    %538 = vmatpush.msra.mxu0 0.0
    %539 = vmatpush.msra.mxu0 0.0
    %540 = vmatpush.msra.mxu0 0.0
    %541 = vmatpush.msra.mxu0 0.0
    %542 = vmatpush.msra.mxu0 0.0
    %543 = vmatpush.msra.mxu0 0.0
    %544 = vmatpush.msra.mxu0 0.0
    %545 = vmatpush.msra.mxu0 0.0
    %546 = vmatpush.msra.mxu0 0.0
    %547 = vmatpush.msra.mxu0 0.0
    %548 = vmatpush.msra.mxu0 0.0
    %549 = vmatpush.msra.mxu0 0.0
    %550 = vmatpush.msra.mxu0 0.0
    %551 = vmatpush.msra.mxu0 0.0
    %552 = vmatpush.msra.mxu0 0.0
    %553 = vmatpush.msra.mxu0 %v533
    %554 = vmatmul.f32.gmra.mxu0 %v536
    %v555 = vpop.f32.mrf.mxu0
    %v556 = vadd.f32 0.0, %v555
    %557 = vdwg.mxu0
    %558 = vst [vmem:[#allocation1] ss:$2 sm:$0xff] %v125
    %v559 = vld.sshfl [vmem:[#allocation1] sm:$0xff pattern:$0x75316420]
    %560 = vrot.lane.b32.xlu0 %v559, 104
    %v561 = vpop.permute.xlu0 %560
    %562 = vrot.lane.b32.xlu0 %v159, 104
    %v563 = vpop.permute.xlu0 %562
    %v564 = vsel %vm164, %v561, 0
    %v566 = vsel %vm164, %v563, 0
    %568 = vmatpush.xpose.msra.mxu0 0.0
    %569 = vmatpush.xpose.msra.mxu0 0.0
    %570 = vmatpush.xpose.msra.mxu0 0.0
    %571 = vmatpush.xpose.msra.mxu0 0.0
    %572 = vmatpush.xpose.msra.mxu0 0.0
    %573 = vmatpush.xpose.msra.mxu0 0.0
    %574 = vmatpush.xpose.msra.mxu0 0.0
    %575 = vmatpush.xpose.msra.mxu0 0.0
    %576 = vmatpush.xpose.msra.mxu0 0.0
    %577 = vmatpush.xpose.msra.mxu0 0.0
    %578 = vmatpush.xpose.msra.mxu0 0.0
    %579 = vmatpush.xpose.msra.mxu0 0.0
    %580 = vmatpush.xpose.msra.mxu0 0.0
    %581 = vmatpush.xpose.msra.mxu0 0.0
    %582 = vmatpush.xpose.msra.mxu0 0.0
    %583 = vmatpush.xpose.msra.mxu0 %v566
    %584 = vmatmul.f32.gmra.mxu0 %v564
    %v585 = vpop.f32.mrf.mxu0
    %v586 = vadd.f32 0.0, %v585
    %587 = vdwg.mxu0
    %588 = vst [vmem:[#allocation1] ss:$2 sm:$0xff] %v127
    %v589 = vld.sshfl [vmem:[#allocation1] sm:$0xff pattern:$0x75316420]
    %590 = vrot.lane.b32.xlu0 %v589, 104
    %v591 = vpop.permute.xlu0 %590
    %592 = vrot.lane.b32.xlu0 %v162, 104
    %v593 = vpop.permute.xlu0 %592
    %v594 = vsel %vm164, %v591, 0
    %v596 = vsel %vm164, %v593, 0
    %598 = vmatpush.xpose.msra.mxu0 0.0
    %599 = vmatpush.xpose.msra.mxu0 0.0
    %600 = vmatpush.xpose.msra.mxu0 0.0
    %601 = vmatpush.xpose.msra.mxu0 0.0
    %602 = vmatpush.xpose.msra.mxu0 0.0
    %603 = vmatpush.xpose.msra.mxu0 0.0
    %604 = vmatpush.xpose.msra.mxu0 0.0
    %605 = vmatpush.xpose.msra.mxu0 0.0
    %606 = vmatpush.xpose.msra.mxu0 0.0
    %607 = vmatpush.xpose.msra.mxu0 0.0
    %608 = vmatpush.xpose.msra.mxu0 0.0
    %609 = vmatpush.xpose.msra.mxu0 0.0
    %610 = vmatpush.xpose.msra.mxu0 0.0
    %611 = vmatpush.xpose.msra.mxu0 0.0
    %612 = vmatpush.xpose.msra.mxu0 0.0
    %613 = vmatpush.xpose.msra.mxu0 %v596
    %614 = vmatmul.f32.gmra.mxu0 %v594
    %v615 = vpop.f32.mrf.mxu0
    %v616 = vadd.f32 0.0, %v615
    %617 = vdwg.mxu0
    %v618 = vsel %vm215, %v586, -inf
    %619 = vmax.xlane.f32.xlu0 %v618
    %v620 = vpop.xlane.xlu0 %619
    %v621 = vsel %vm215, %v616, -inf
    %622 = vmax.xlane.f32.xlu0 %v621
    %v623 = vpop.xlane.xlu0 %622
    %v624 = vsub.f32 %v586, %v620
    %v625 = vsub.f32 %v616, %v623
    %v626 = vmul.f32 %v624, 1.442695
    %v627 = vpow.pop %v626
    %v628 = vmul.f32 %v625, 1.442695
    %v629 = vpow.pop %v628
    %v630 = vsel %vm215, %v627, 0.0
    %631 = vadd.xlane.f32.xlu0 %v630
    %v632 = vpop.xlane.xlu0 %631
    %v633 = vsel %vm215, %v629, 0.0
    %634 = vadd.xlane.f32.xlu0 %v633
    %v635 = vpop.xlane.xlu0 %634
    %v636 = vrcp.pop %v632
    %v637 = vrcp.pop %v635
    %v638 = vmul.f32 %v627, %v636
    %v639 = vmul.f32 %v629, %v637
    %640 = vrot.lane.b32.xlu0 %v159, 72
    %v641 = vpop.permute.xlu0 %640
    %v644 = vsel %vm164, %v638, 0
    %646 = vmatpush.msra.mxu0 0.0
    %647 = vmatpush.msra.mxu0 0.0
    %648 = vmatpush.msra.mxu0 0.0
    %649 = vmatpush.msra.mxu0 0.0
    %650 = vmatpush.msra.mxu0 0.0
    %651 = vmatpush.msra.mxu0 0.0
    %652 = vmatpush.msra.mxu0 0.0
    %653 = vmatpush.msra.mxu0 0.0
    %654 = vmatpush.msra.mxu0 0.0
    %655 = vmatpush.msra.mxu0 0.0
    %656 = vmatpush.msra.mxu0 0.0
    %657 = vmatpush.msra.mxu0 0.0
    %658 = vmatpush.msra.mxu0 0.0
    %659 = vmatpush.msra.mxu0 0.0
    %660 = vmatpush.msra.mxu0 0.0
    %661 = vmatpush.msra.mxu0 %v641
    %662 = vmatmul.f32.gmra.mxu0 %v644
    %v663 = vpop.f32.mrf.mxu0
    %v664 = vadd.f32 0.0, %v663
    %665 = vdwg.mxu0
    %666 = vrot.lane.b32.xlu0 %v162, 72
    %v667 = vpop.permute.xlu0 %666
    %v670 = vsel %vm164, %v639, 0
    %672 = vmatpush.msra.mxu0 0.0
    %673 = vmatpush.msra.mxu0 0.0
    %674 = vmatpush.msra.mxu0 0.0
    %675 = vmatpush.msra.mxu0 0.0
    %676 = vmatpush.msra.mxu0 0.0
    %677 = vmatpush.msra.mxu0 0.0
    %678 = vmatpush.msra.mxu0 0.0
    %679 = vmatpush.msra.mxu0 0.0
    %680 = vmatpush.msra.mxu0 0.0
    %681 = vmatpush.msra.mxu0 0.0
    %682 = vmatpush.msra.mxu0 0.0
    %683 = vmatpush.msra.mxu0 0.0
    %684 = vmatpush.msra.mxu0 0.0
    %685 = vmatpush.msra.mxu0 0.0
    %686 = vmatpush.msra.mxu0 0.0
    %687 = vmatpush.msra.mxu0 %v667
    %688 = vmatmul.f32.gmra.mxu0 %v670
    %v689 = vpop.f32.mrf.mxu0
    %v690 = vadd.f32 0.0, %v689
    %691 = vdwg.mxu0
    %692 = vrot.lane.b32.xlu0 %v370, 8
    %v693 = vpop.permute.xlu0 %692
    %694 = vrot.lane.b32.xlu0 %v371, 8
    %v695 = vpop.permute.xlu0 %694
    %698 = vrot.lane.b32.xlu0 %v504, 16
    %v699 = vpop.permute.xlu0 %698
    %700 = vrot.lane.b32.xlu0 %v505, 16
    %v701 = vpop.permute.xlu0 %700
    %704 = vrot.lane.b32.xlu0 %v638, 24
    %v705 = vpop.permute.xlu0 %704
    %706 = vrot.lane.b32.xlu0 %v639, 24
    %v707 = vpop.permute.xlu0 %706
    %v710 = vsel %vm164, %v236, %v693
    %v711 = vsel %vm164, %v237, %v695
    %v712 = vsel %vm134, %v710, %v699
    %v713 = vsel %vm134, %v711, %v701
    %vm714 = vcmask 195584
    %v715 = vsel %vm714, %v712, %v705
    %v716 = vsel %vm714, %v713, %v707
    %vm717 = vcmask 257024
    %718 = vst.msk [vmem:[#allocation4] sm:$0xf] %vm717, %v715
    %719 = vst.msk [vmem:[#allocation4 + $0x4] sm:$0xf] %vm717, %v716
    %722 = vrot.lane.b32.xlu0 %v396, 8
    %v723 = vpop.permute.xlu0 %722
    %724 = vrot.lane.b32.xlu0 %v422, 8
    %v725 = vpop.permute.xlu0 %724
    %730 = vrot.lane.b32.xlu0 %v530, 16
    %v731 = vpop.permute.xlu0 %730
    %732 = vrot.lane.b32.xlu0 %v556, 16
    %v733 = vpop.permute.xlu0 %732
    %738 = vrot.lane.b32.xlu0 %v664, 24
    %v739 = vpop.permute.xlu0 %738
    %740 = vrot.lane.b32.xlu0 %v690, 24
    %v741 = vpop.permute.xlu0 %740
    %v744 = vsel %vm164, %v262, %v723
    %v745 = vsel %vm164, %v288, %v725
    %v746 = vsel %vm134, %v744, %v731
    %v747 = vsel %vm134, %v745, %v733
    %v748 = vsel %vm714, %v746, %v739
    %v749 = vsel %vm714, %v747, %v741
    %752 = vst [vmem:[#allocation1] ss:$2 sm:$0xff] %v748
    %s753 = scalar_lea.vmem [#allocation1], 1
    %754 = vst [vmem:[%s753] ss:$2 sm:$0xff] %v749
    %v755 = vld.sshfl [vmem:[#allocation1] sm:$0xff pattern:$0x75316420]
    %v757 = vadd.f32 %v51, %v755
    %v758 = vsel %vm58, %v757, 0.0
    %759 = vadd.xlane.f32.xlu0 %v758
    %v760 = vpop.xlane.xlu0 %759
    %v761 = vrcp.pop 32.0
    %v762 = vmul.f32 32.0, %v761
    %v763 = vsub.f32 1.0, %v762
    %v764 = vmul.f32 %v761, %v763
    %v765 = vadd.f32 %v761, %v764
    %vm766 = vweird.f32 %v761
    %v767 = vsel %vm766, %v761, %v765
    %v768 = vmul.f32 %v760, %v767
    %v769 = vmul.f32 %v757, %v757
    %v770 = vsel %vm58, %v769, 0.0
    %771 = vadd.xlane.f32.xlu0 %v770
    %v772 = vpop.xlane.xlu0 %771
    %v773 = vmul.f32 %v772, %v767
    %v774 = vsub.f32 %v757, %v768
    %v775 = vmul.f32 %v768, %v768
    %v776 = vsub.f32 %v773, %v775
    %v777 = vadd.f32 %v776, 1e-05
    %v778 = vrsqrt.pop %v777
    %v779 = vmul.f32 %v778, %v777
    %v780 = vmul.f32 %v779, %v778
    %v781 = vmul.f32 0.5, %v780
    %v782 = vsub.f32 1.5, %v781
    %v783 = vmul.f32 %v778, %v782
    %vm784 = vweird.f32 %v777
    %vm785 = vweird.f32 %v778
    %vm786 = vmor %vm784, %vm785
    %v787 = vsel %vm786, %v778, %v783
    %v788 = vmul.f32 %v774, %v787
    %v789 = vld [vmem:[%s10] sm:$0x1]
    %v791 = vperm.slane %v789, 0
    %v793 = vmul.f32 %v788, %v791
    %v794 = vld [vmem:[%s11] sm:$0x1]
    %v796 = vperm.slane %v794, 0
    %v798 = vadd.f32 %v793, %v796
    %v799 = vld [vmem:[%s6] sm:$0xff]
    %v800 = vld [vmem:[%s6 + $0x8] sm:$0xff]
    %v801 = vld [vmem:[%s6 + $0x10] sm:$0xff]
    %v802 = vld [vmem:[%s6 + $0x18] sm:$0xff]
    %v803 = vld [vmem:[%s7] sm:$0x1]
    %v805 = vperm.slane %v803, 0
    %v808 = vsel %vm58, %v798, 0
    %810 = vmatpush.msra.mxu0 0.0
    %811 = vmatpush.msra.mxu0 0.0
    %812 = vmatpush.msra.mxu0 0.0
    %813 = vmatpush.msra.mxu0 0.0
    %814 = vmatpush.msra.mxu0 0.0
    %815 = vmatpush.msra.mxu0 0.0
    %816 = vmatpush.msra.mxu0 0.0
    %817 = vmatpush.msra.mxu0 0.0
    %818 = vmatpush.msra.mxu0 0.0
    %819 = vmatpush.msra.mxu0 0.0
    %820 = vmatpush.msra.mxu0 0.0
    %821 = vmatpush.msra.mxu0 0.0
    %822 = vmatpush.msra.mxu0 %v802
    %823 = vmatpush.msra.mxu0 %v801
    %824 = vmatpush.msra.mxu0 %v800
    %825 = vmatpush.msra.mxu0 %v799
    %826 = vmatmul.f32.gmra.mxu0 %v808
    %v827 = vpop.f32.mrf.mxu0
    %v828 = vadd.f32 %v805, %v827
    %829 = vdwg.mxu0
    %v830 = vmax.f32 %v828, 0.0
    %v831 = vld [vmem:[%s8] sm:$0xff]
    %v832 = vld [vmem:[%s8 + $0x8] sm:$0xff]
    %v833 = vld [vmem:[%s8 + $0x10] sm:$0xff]
    %v834 = vld [vmem:[%s8 + $0x18] sm:$0xff]
    %v835 = vld [vmem:[%s8 + $0x20] sm:$0xff]
    %v836 = vld [vmem:[%s8 + $0x28] sm:$0xff]
    %v837 = vld [vmem:[%s8 + $0x30] sm:$0xff]
    %v838 = vld [vmem:[%s8 + $0x38] sm:$0xff]
    %v839 = vld [vmem:[%s8 + $0x40] sm:$0xff]
    %v840 = vld [vmem:[%s8 + $0x48] sm:$0xff]
    %v841 = vld [vmem:[%s8 + $0x50] sm:$0xff]
    %v842 = vld [vmem:[%s8 + $0x58] sm:$0xff]
    %v843 = vld [vmem:[%s8 + $0x60] sm:$0xff]
    %v844 = vld [vmem:[%s8 + $0x68] sm:$0xff]
    %v845 = vld [vmem:[%s8 + $0x70] sm:$0xff]
    %v846 = vld [vmem:[%s8 + $0x78] sm:$0xff]
    %v847 = vld [vmem:[%s9] sm:$0x1]
    %v849 = vperm.slane %v847, 0
    %851 = vmatpush.msra.mxu0 %v846
    %852 = vmatpush.msra.mxu0 %v845
    %853 = vmatpush.msra.mxu0 %v844
    %854 = vmatpush.msra.mxu0 %v843
    %855 = vmatpush.msra.mxu0 %v842
    %856 = vmatpush.msra.mxu0 %v841
    %857 = vmatpush.msra.mxu0 %v840
    %858 = vmatpush.msra.mxu0 %v839
    %859 = vmatpush.msra.mxu0 %v838
    %860 = vmatpush.msra.mxu0 %v837
    %861 = vmatpush.msra.mxu0 %v836
    %862 = vmatpush.msra.mxu0 %v835
    %863 = vmatpush.msra.mxu0 %v834
    %864 = vmatpush.msra.mxu0 %v833
    %865 = vmatpush.msra.mxu0 %v832
    %866 = vmatpush.msra.mxu0 %v831
    %867 = vmatmul.f32.gmra.mxu0 %v830
    %v868 = vpop.f32.mrf.mxu0
    %v869 = vadd.f32 %v849, %v868
    %870 = vdwg.mxu0
    %v871 = vadd.f32 %v798, %v869
    %v872 = vsel %vm58, %v871, 0.0
    %873 = vadd.xlane.f32.xlu0 %v872
    %v874 = vpop.xlane.xlu0 %873
    %v875 = vmul.f32 %v874, %v767
    %v876 = vmul.f32 %v871, %v871
    %v877 = vsel %vm58, %v876, 0.0
    %878 = vadd.xlane.f32.xlu0 %v877
    %v879 = vpop.xlane.xlu0 %878
    %v880 = vmul.f32 %v879, %v767
    %v881 = vsub.f32 %v871, %v875
    %v882 = vmul.f32 %v875, %v875
    %v883 = vsub.f32 %v880, %v882
    %v884 = vadd.f32 %v883, 1e-05
    %v885 = vrsqrt.pop %v884
    %v886 = vmul.f32 %v885, %v884
    %v887 = vmul.f32 %v886, %v885
    %v888 = vmul.f32 0.5, %v887
    %v889 = vsub.f32 1.5, %v888
    %v890 = vmul.f32 %v885, %v889
    %vm891 = vweird.f32 %v884
    %vm892 = vweird.f32 %v885
    %vm893 = vmor %vm891, %vm892
    %v894 = vsel %vm893, %v885, %v890
    %v895 = vmul.f32 %v881, %v894
    %v896 = vld [vmem:[%s12] sm:$0x1]
    %v898 = vperm.slane %v896, 0
    %v900 = vmul.f32 %v895, %v898
    %v901 = vld [vmem:[%s13] sm:$0x1]
    %v903 = vperm.slane %v901, 0
    %v905 = vadd.f32 %v900, %v903
    %906 = vst.msk [vmem:[#allocation2] sm:$0xff] %vm58, %v905
    // Predicated region
    $region58: #{tpu_custom_call.1} parent=1 // pred_check
      _
    $region59: #{tpu_custom_call.1} parent=1 // pred_check_branch
      %908 = sbr.rel (0) target = $region61
    $region60: #{tpu_custom_call.1} parent=1 // pred_region
      %910 = vsyncadd [#allocation3], 0
      %s912 = sshll.u32 [#allocation2], 4
      %s913 = int_to_ptr.vmem [resolvable:$true] %s912
      %s914 = sshll.u32 %s14, 4
      %s915 = int_to_ptr.hbm [resolvable:$true] %s914
      %917 = dma.vmem_to_hbm [thread:$0]  %s913, 128, %s915, [#allocation3]
    $region61: #{tpu_custom_call.1} parent=1 // pred_fallthru
      _
    // Predicated region
    $region62: #{tpu_custom_call.1} parent=1 // pred_check
      _
    $region63: #{tpu_custom_call.1} parent=1 // pred_check_branch
      %919 = sbr.rel (0) target = $region65
    $region64: #{tpu_custom_call.1} parent=1 // pred_region
      %921 = vsyncadd [#allocation5], 0
      %s922 = sshll.u32 [#allocation4], 4
      %s923 = int_to_ptr.vmem [resolvable:$true] %s922
      %s924 = sshll.u32 %s15, 4
      %s925 = int_to_ptr.hbm [resolvable:$true] %s924
      %930 = dma.vmem_to_hbm [thread:$0]  %s923, 128, %s925, [#allocation5], 64, 64, 4
    $region65: #{tpu_custom_call.1} parent=1 // pred_fallthru
      _
    // Predicated region
    $region66: #{tpu_custom_call.1} parent=1 // pred_check
      _
    $region67: #{tpu_custom_call.1} parent=1 // pred_check_branch
      %932 = sbr.rel (0) target = $region69
    $region68: #{tpu_custom_call.1} parent=1 // pred_region
      %934 = dma.done [#allocation3], 128
    $region69: #{tpu_custom_call.1} parent=1 // pred_fallthru
      _
    // Predicated region
    $region70: #{tpu_custom_call.1} parent=1 // pred_check
      _
    $region71: #{tpu_custom_call.1} parent=1 // pred_check_branch
      %936 = sbr.rel (0) target = $region73
    $region72: #{tpu_custom_call.1} parent=1 // pred_region
      %938 = dma.done [#allocation5], 128
    $region73: #{tpu_custom_call.1} parent=1 // pred_fallthru
      _
    %939 = vsyncpa [#allocation3], 1
    %940 = vsyncpa [#allocation5], 1

</llo_original>
